<compile_context>
chip_gen: v7x
topology: tpu7x:2x2x1
jax: 0.10.0
libtpu: 0.0.40
codegen_flags: <defaults>
</compile_context>

<pallas_src>
import functools
import math

import jax
import jax.numpy as jnp
from jax.experimental import pallas as pl
from jax.experimental.pallas import tpu as pltpu


def stgcn_kernel(x_ref, a_ref, ws_ref, wt_ref, bn_ref, out_ref,
                 sum_ref, ssq_ref, *, n_total, bn_eps):
    # x_ref : (C, TN)  bf16/f32   column tile, (b,t,v)-ordered
    # a_ref : (TN, TN) bf16/f32   resident block-diagonal I (x) softmax(adj)
    # ws_ref: (O, C)              spatial 1x1 conv weight
    # wt_ref: (O, O)              temporal 1x1 conv weight (k=1)
    # bn_ref: (O, 3)   f32        [gamma | beta | temporal bias]
    # out_ref: (O, TN) f32
    # sum_ref/ssq_ref: (O, 1) f32 resident per-channel BN accumulators
    p = pl.program_id(0)          # 0 = statistics pass, 1 = output pass
    i = pl.program_id(1)          # column-tile index
    cin = ws_ref.shape[1]
    cout = ws_ref.shape[0]
    mxu_dt = x_ref.dtype

    def graph_then_spatial():
        # Associativity: keep the dominant TN-contraction on the smaller
        # channel side.  f32 accumulation; operands stay in mxu_dt (bf16).
        if cin <= cout:
            t = jnp.dot(x_ref[...], a_ref[...],
                        preferred_element_type=jnp.float32)        # (C, TN)
            return jnp.dot(ws_ref[...], t.astype(mxu_dt),
                           preferred_element_type=jnp.float32)     # (O, TN)
        else:
            h = jnp.dot(ws_ref[...], x_ref[...],
                        preferred_element_type=jnp.float32)        # (O, TN)
            return jnp.dot(h.astype(mxu_dt), a_ref[...],
                           preferred_element_type=jnp.float32)     # (O, TN)

    # ---- pass 0: accumulate per-channel sum / sum-of-squares ---------------
    @pl.when(p == 0)
    def _stats_pass():
        @pl.when(i == 0)
        def _init():
            sum_ref[...] = jnp.zeros_like(sum_ref)
            ssq_ref[...] = jnp.zeros_like(ssq_ref)

        g = graph_then_spatial()                                   # f32
        sum_ref[...] += jnp.sum(g, axis=1, keepdims=True)
        ssq_ref[...] += jnp.sum(g * g, axis=1, keepdims=True)

    # ---- pass 1: normalize + ReLU + temporal 1x1 conv ----------------------
    @pl.when(p == 1)
    def _output_pass():
        g = graph_then_spatial()                                   # recompute
        inv_n = 1.0 / n_total
        mean = sum_ref[...] * inv_n
        # Single-pass variance E[x^2]-E[x]^2; fine here because the spatial
        # bias is folded out so per-channel |mean| << std.
        # TODO(synk): switch to a pilot-mean / 3-pass variance if that changes.
        var = ssq_ref[...] * inv_n - mean * mean
        gamma = bn_ref[:, 0:1]
        beta = bn_ref[:, 1:2]
        b_t = bn_ref[:, 2:3]
        scale = gamma * jax.lax.rsqrt(var + bn_eps)                # (O, 1)
        shift = beta - mean * scale                                # (O, 1)
        y = jnp.maximum(g * scale + shift, 0.0)                    # (O, TN) f32
        out_ref[...] = jnp.dot(wt_ref[...], y.astype(mxu_dt),
                               preferred_element_type=jnp.float32) + b_t


def _choose_column_tile(n, v, cap=1536):
    """Largest lane-dense tile (multiple of lcm(v,128)) dividing n.

    Prefers >= 2 grid steps (pipelining, future megacore); caps the tile so a
    double-buffered (tn, tn) A-block stays well inside v7x's 64 MiB VMEM.
    Falls back to one full-width tile (block == full array dims is legal).
    """
    base = v * 128 // math.gcd(v, 128)            # 384 for v = 24
    if n % base != 0:
        return n
    cands = [m for m in range(base, min(n, cap) + 1, base) if n % m == 0]
    multi = [m for m in cands if n // m >= 2]
    if multi:
        return multi[-1]
    return cands[-1] if cands else n


def stgcn_layer(x, params, *, mxu_dtype=jnp.bfloat16):
    """x: (B, C, T, V) NCHW (PyTorch convention) -> (B, C_out, T, V)."""
    B, C, T, V = x.shape
    ws = params["w_spatial"]                       # (O, C)
    wt = params["w_temporal"]                      # (O, O)
    O = ws.shape[0]
    N = B * T * V

    tn = _choose_column_tile(N, V)
    nt = N // tn
    assert tn % V == 0 and N % tn == 0

    # softmax(adj) is a tiny per-call constant; only ONE (tn, tn) diagonal
    # block is ever needed (constant index_map -> DMA'd once, stays resident).
    a = jax.nn.softmax(params["adj"].astype(jnp.float32), axis=-1)   # (V, V)
    a_tile = jnp.kron(jnp.eye(tn // V, dtype=jnp.float32), a)        # (tn, tn)

    # glue: NCHW -> channels-on-sublanes, lane-dense (C, B*T*V).
    # TODO(synk): at scale keep activations in this layout between layers
    # instead of transposing around every pallas_call.
    x2d = jnp.transpose(x, (1, 0, 2, 3)).reshape(C, N)

    # gamma / beta / temporal bias packed into one small f32 input.
    bn_pack = jnp.stack([params["bn_gamma"], params["bn_beta"],
                         params["b_temporal"]], axis=1).astype(jnp.float32)

    # VMEM budget derived from the chosen tile (double-buffered), with headroom.
    dsz = jnp.dtype(mxu_dtype).itemsize
    est = 2 * (tn * tn * dsz + C * tn * dsz + O * tn * 4
               + O * C * dsz + O * O * dsz + O * 3 * 4) + 2 * O * 4
    vmem_limit = int(min(max(4 * est, 8 << 20), 64 << 20))

    kernel = functools.partial(stgcn_kernel, n_total=N, bn_eps=1e-5)

    out2d = pl.pallas_call(
        kernel,
        out_shape=jax.ShapeDtypeStruct((O, N), jnp.float32),
        grid_spec=pltpu.PrefetchScalarGridSpec(
            num_scalar_prefetch=0,
            grid=(2, nt),                                   # (pass, column tile)
            in_specs=[
                pl.BlockSpec((C, tn), lambda p, i: (0, i)),        # x tile
                pl.BlockSpec((tn, tn), lambda p, i: (0, 0)),       # resident A
                pl.BlockSpec((O, C), lambda p, i: (0, 0)),         # Ws
                pl.BlockSpec((O, O), lambda p, i: (0, 0)),         # Wt
                pl.BlockSpec((O, 3), lambda p, i: (0, 0)),         # gamma/beta/bt
            ],
            # Pass 0 never writes the output; pinning its block index to tile 0
            # (i * p == 0) keeps the out buffer un-flushed until pass 1 writes
            # real data -> no garbage / duplicate HBM writebacks.
            out_specs=pl.BlockSpec((O, tn), lambda p, i: (0, i * p)),
            scratch_shapes=[pltpu.VMEM((O, 1), jnp.float32),       # sum(g)
                            pltpu.VMEM((O, 1), jnp.float32)],      # sum(g*g)
        ),
        compiler_params=pltpu.CompilerParams(
            # The BN statistics reduce across column tiles, so the tile axis
            # cannot be megacore-"parallel" with a single scratch accumulator.
            # TODO(synk): v7x megacore -> per-core partial stats + cross-core combine.
            dimension_semantics=("arbitrary", "arbitrary"),
            vmem_limit_bytes=vmem_limit),
    )(x2d.astype(mxu_dtype), a_tile.astype(mxu_dtype),
      ws.astype(mxu_dtype), wt.astype(mxu_dtype), bn_pack)

    return jnp.transpose(out2d.reshape(O, B, T, V), (1, 0, 2, 3))


def stgcn_reference(x, params):
    """Pure-JAX f32 mirror of the PyTorch forward (training-mode BatchNorm)."""
    adj = jax.nn.softmax(params["adj"], axis=-1)
    xg = jnp.einsum('bctv,vm->bctm', x, adj)
    ys = jnp.einsum('oc,bctv->botv', params["w_spatial"], xg) \
        + params["b_spatial"][None, :, None, None]
    mean = jnp.mean(ys, axis=(0, 2, 3), keepdims=True)
    var = jnp.mean((ys - mean) ** 2, axis=(0, 2, 3), keepdims=True)
    yn = (ys - mean) / jnp.sqrt(var + 1e-5)
    yn = yn * params["bn_gamma"][None, :, None, None] \
        + params["bn_beta"][None, :, None, None]
    yr = jnp.maximum(yn, 0.0)
    z = jnp.einsum('po,botv->bptv', params["w_temporal"], yr) \
        + params["b_temporal"][None, :, None, None]
    return z


if __name__ == "__main__":
    B, C_in, C_out, T, V = 2, 4, 8, 16, 24   # V fixed to 24 by the adj parameter
    key = jax.random.PRNGKey(0)
    k = jax.random.split(key, 8)

    x = jax.random.normal(k[0], (B, C_in, T, V), jnp.float32)
    params = {
        "w_spatial": 0.3 * jax.random.normal(k[1], (C_out, C_in), jnp.float32),
        "b_spatial": 0.1 * jax.random.normal(k[2], (C_out,), jnp.float32),
        "w_temporal": 0.3 * jax.random.normal(k[3], (C_out, C_out), jnp.float32),
        "b_temporal": 0.1 * jax.random.normal(k[4], (C_out,), jnp.float32),
        "bn_gamma": 1.0 + 0.1 * jax.random.normal(k[5], (C_out,), jnp.float32),
        "bn_beta": 0.1 * jax.random.normal(k[6], (C_out,), jnp.float32),
        # module init is 0.1*ones(24,24); perturb so softmax is non-trivial.
        "adj": 0.1 * jnp.ones((V, V), jnp.float32)
               + 0.05 * jax.random.normal(k[7], (V, V), jnp.float32),
    }

    mxu_dtype = jnp.bfloat16            # review-recommended MXU operand dtype
    out = jax.block_until_ready(stgcn_layer(x, params, mxu_dtype=mxu_dtype))
    ref = stgcn_reference(x, params)

    assert out.shape == (B, C_out, T, V), out.shape
    max_err = float(jnp.max(jnp.abs(out - ref)))
    # bf16 MXU operands (f32 accumulation & f32 BN) deviate from the f32
    # reference by ~1e-2 max here: the 2^-8 operand rounding is amplified
    # ~8-16x by BatchNorm's 1/sigma and then summed by the temporal conv.
    # With mxu_dtype=jnp.float32 the same kernel stays below 2e-3.
    tol = 2e-3 if mxu_dtype == jnp.float32 else 5e-2
    assert max_err < tol, f"max abs err {max_err}"
    print("KERNEL_OK")
</pallas_src>

<mosaic_0001>
module attributes {stable_mosaic.version = 11 : i64} {
  func.func @stgcn_kernel(%arg0: i32, %arg1: i32, %arg2: memref<4x384xbf16, #tpu.memory_space<vmem>>, %arg3: memref<384x384xbf16, #tpu.memory_space<vmem>>, %arg4: memref<8x4xbf16, #tpu.memory_space<vmem>>, %arg5: memref<8x8xbf16, #tpu.memory_space<vmem>>, %arg6: memref<8x3xf32, #tpu.memory_space<vmem>>, %arg7: memref<8x384xf32, #tpu.memory_space<vmem>>, %arg8: memref<8x1xf32, #tpu.memory_space<vmem>>, %arg9: memref<8x1xf32, #tpu.memory_space<vmem>>) attributes {dimension_semantics = [#tpu.dimension_semantics<arbitrary>, #tpu.dimension_semantics<arbitrary>], iteration_bounds = array<i64: 2, 2>, scalar_prefetch = 0 : i64, scratch_operands = 2 : i64, tpu.core_type = #tpu.core_type<tc>, window_params = [{transform_indices = @transform_0, window_bounds = array<i64: 4, 384>}, {pipeline_mode = #tpu.pipeline_mode<synchronous>, transform_indices = @transform_1, window_bounds = array<i64: 384, 384>}, {pipeline_mode = #tpu.pipeline_mode<synchronous>, transform_indices = @transform_2, window_bounds = array<i64: 8, 4>}, {pipeline_mode = #tpu.pipeline_mode<synchronous>, transform_indices = @transform_3, window_bounds = array<i64: 8, 8>}, {pipeline_mode = #tpu.pipeline_mode<synchronous>, transform_indices = @transform_4, window_bounds = array<i64: 8, 3>}, {transform_indices = @transform_5, window_bounds = array<i64: 8, 384>}]} {
    %c0_i32 = arith.constant 0 : i32
    %0 = arith.cmpi eq, %arg0, %c0_i32 : i32
    %1 = arith.extui %0 : i1 to i32
    %c0_i32_0 = arith.constant 0 : i32
    %2 = arith.cmpi ne, %1, %c0_i32_0 : i32
    scf.if %2 {
      %c0_i32_2 = arith.constant 0 : i32
      %6 = arith.cmpi eq, %arg1, %c0_i32_2 : i32
      %7 = arith.extui %6 : i1 to i32
      %c0_i32_3 = arith.constant 0 : i32
      %8 = arith.cmpi ne, %7, %c0_i32_3 : i32
      scf.if %8 {
        %cst_20 = arith.constant 0.000000e+00 : f32
        %26 = vector.broadcast %cst_20 : f32 to vector<8x1xf32>
        %c0_21 = arith.constant 0 : index
        %c0_22 = arith.constant 0 : index
        %27 = vector.load %arg8[%c0_21, %c0_22] : memref<8x1xf32, #tpu.memory_space<vmem>>, vector<8x1xf32>
        tpu.vector_store %arg8[%c0_21, %c0_22], %26 {strides = array<i32>} : memref<8x1xf32, #tpu.memory_space<vmem>>, vector<8x1xf32>,
        %cst_23 = arith.constant 0.000000e+00 : f32
        %28 = vector.broadcast %cst_23 : f32 to vector<8x1xf32>
        %c0_24 = arith.constant 0 : index
        %c0_25 = arith.constant 0 : index
        %29 = vector.load %arg9[%c0_24, %c0_25] : memref<8x1xf32, #tpu.memory_space<vmem>>, vector<8x1xf32>
        tpu.vector_store %arg9[%c0_24, %c0_25], %28 {strides = array<i32>} : memref<8x1xf32, #tpu.memory_space<vmem>>, vector<8x1xf32>,
      } else {
      }
      %c0 = arith.constant 0 : index
      %c0_4 = arith.constant 0 : index
      %9 = vector.load %arg2[%c0, %c0_4] : memref<4x384xbf16, #tpu.memory_space<vmem>>, vector<4x384xbf16>
      %c0_5 = arith.constant 0 : index
      %c0_6 = arith.constant 0 : index
      %10 = vector.load %arg3[%c0_5, %c0_6] : memref<384x384xbf16, #tpu.memory_space<vmem>>, vector<384x384xbf16>
      %cst = arith.constant dense<0.000000e+00> : vector<4x384xf32>
      %11 = tpu.matmul %9, %10, %cst {dimension_numbers = #tpu.dot_dimension_numbers<[1], [0], [0], [1], [0, 0, 1, 1], [], []>} : vector<4x384xbf16>, vector<384x384xbf16>, vector<4x384xf32> -> vector<4x384xf32>
      %c0_7 = arith.constant 0 : index
      %c0_8 = arith.constant 0 : index
      %12 = vector.load %arg4[%c0_7, %c0_8] : memref<8x4xbf16, #tpu.memory_space<vmem>>, vector<8x4xbf16>
      %13 = arith.truncf %11 : vector<4x384xf32> to vector<4x384xbf16>
      %cst_9 = arith.constant dense<0.000000e+00> : vector<8x384xf32>
      %14 = tpu.matmul %12, %13, %cst_9 {dimension_numbers = #tpu.dot_dimension_numbers<[1], [0], [0], [1], [0, 0, 1, 1], [], []>} : vector<8x4xbf16>, vector<4x384xbf16>, vector<8x384xf32> -> vector<8x384xf32>
      %c0_10 = arith.constant 0 : index
      %c0_11 = arith.constant 0 : index
      %15 = vector.load %arg8[%c0_10, %c0_11] : memref<8x1xf32, #tpu.memory_space<vmem>>, vector<8x1xf32>
      %cst_12 = arith.constant dense<0.000000e+00> : vector<8xf32>
      %16 = vector.multi_reduction <add>, %14, %cst_12 [1] : vector<8x384xf32> to vector<8xf32>
      %17 = vector.shape_cast %16 : vector<8xf32> to vector<8x1xf32>
      %18 = arith.addf %15, %17 : vector<8x1xf32>
      %c0_13 = arith.constant 0 : index
      %c0_14 = arith.constant 0 : index
      %19 = vector.load %arg8[%c0_13, %c0_14] : memref<8x1xf32, #tpu.memory_space<vmem>>, vector<8x1xf32>
      tpu.vector_store %arg8[%c0_13, %c0_14], %18 {strides = array<i32>} : memref<8x1xf32, #tpu.memory_space<vmem>>, vector<8x1xf32>,
      %c0_15 = arith.constant 0 : index
      %c0_16 = arith.constant 0 : index
      %20 = vector.load %arg9[%c0_15, %c0_16] : memref<8x1xf32, #tpu.memory_space<vmem>>, vector<8x1xf32>
      %21 = arith.mulf %14, %14 : vector<8x384xf32>
      %cst_17 = arith.constant dense<0.000000e+00> : vector<8xf32>
      %22 = vector.multi_reduction <add>, %21, %cst_17 [1] : vector<8x384xf32> to vector<8xf32>
      %23 = vector.shape_cast %22 : vector<8xf32> to vector<8x1xf32>
      %24 = arith.addf %20, %23 : vector<8x1xf32>
      %c0_18 = arith.constant 0 : index
      %c0_19 = arith.constant 0 : index
      %25 = vector.load %arg9[%c0_18, %c0_19] : memref<8x1xf32, #tpu.memory_space<vmem>>, vector<8x1xf32>
      tpu.vector_store %arg9[%c0_18, %c0_19], %24 {strides = array<i32>} : memref<8x1xf32, #tpu.memory_space<vmem>>, vector<8x1xf32>,
    } else {
    }
    %c1_i32 = arith.constant 1 : i32
    %3 = arith.cmpi eq, %arg0, %c1_i32 : i32
    %4 = arith.extui %3 : i1 to i32
    %c0_i32_1 = arith.constant 0 : i32
    %5 = arith.cmpi ne, %4, %c0_i32_1 : i32
    scf.if %5 {
      %c0 = arith.constant 0 : index
      %c0_2 = arith.constant 0 : index
      %6 = vector.load %arg2[%c0, %c0_2] : memref<4x384xbf16, #tpu.memory_space<vmem>>, vector<4x384xbf16>
      %c0_3 = arith.constant 0 : index
      %c0_4 = arith.constant 0 : index
      %7 = vector.load %arg3[%c0_3, %c0_4] : memref<384x384xbf16, #tpu.memory_space<vmem>>, vector<384x384xbf16>
      %cst = arith.constant dense<0.000000e+00> : vector<4x384xf32>
      %8 = tpu.matmul %6, %7, %cst {dimension_numbers = #tpu.dot_dimension_numbers<[1], [0], [0], [1], [0, 0, 1, 1], [], []>} : vector<4x384xbf16>, vector<384x384xbf16>, vector<4x384xf32> -> vector<4x384xf32>
      %c0_5 = arith.constant 0 : index
      %c0_6 = arith.constant 0 : index
      %9 = vector.load %arg4[%c0_5, %c0_6] : memref<8x4xbf16, #tpu.memory_space<vmem>>, vector<8x4xbf16>
      %10 = arith.truncf %8 : vector<4x384xf32> to vector<4x384xbf16>
      %cst_7 = arith.constant dense<0.000000e+00> : vector<8x384xf32>
      %11 = tpu.matmul %9, %10, %cst_7 {dimension_numbers = #tpu.dot_dimension_numbers<[1], [0], [0], [1], [0, 0, 1, 1], [], []>} : vector<8x4xbf16>, vector<4x384xbf16>, vector<8x384xf32> -> vector<8x384xf32>
      %c0_8 = arith.constant 0 : index
      %c0_9 = arith.constant 0 : index
      %12 = vector.load %arg8[%c0_8, %c0_9] : memref<8x1xf32, #tpu.memory_space<vmem>>, vector<8x1xf32>
      %cst_10 = arith.constant 0.00130208337 : f32
      %13 = vector.broadcast %cst_10 : f32 to vector<8x1xf32>
      %14 = arith.mulf %12, %13 : vector<8x1xf32>
      %c0_11 = arith.constant 0 : index
      %c0_12 = arith.constant 0 : index
      %15 = vector.load %arg9[%c0_11, %c0_12] : memref<8x1xf32, #tpu.memory_space<vmem>>, vector<8x1xf32>
      %cst_13 = arith.constant 0.00130208337 : f32
      %16 = vector.broadcast %cst_13 : f32 to vector<8x1xf32>
      %17 = arith.mulf %15, %16 : vector<8x1xf32>
      %18 = arith.mulf %14, %14 : vector<8x1xf32>
      %19 = arith.subf %17, %18 : vector<8x1xf32>
      %c0_14 = arith.constant 0 : index
      %c0_15 = arith.constant 0 : index
      %20 = vector.load %arg6[%c0_14, %c0_15] : memref<8x3xf32, #tpu.memory_space<vmem>>, vector<8x1xf32>
      %c0_16 = arith.constant 0 : index
      %c1 = arith.constant 1 : index
      %21 = vector.load %arg6[%c0_16, %c1] : memref<8x3xf32, #tpu.memory_space<vmem>>, vector<8x1xf32>
      %c0_17 = arith.constant 0 : index
      %c2 = arith.constant 2 : index
      %22 = vector.load %arg6[%c0_17, %c2] : memref<8x3xf32, #tpu.memory_space<vmem>>, vector<8x1xf32>
      %cst_18 = arith.constant 9.99999974E-6 : f32
      %23 = vector.broadcast %cst_18 : f32 to vector<8x1xf32>
      %24 = arith.addf %19, %23 : vector<8x1xf32>
      %25 = math.rsqrt %24 : vector<8x1xf32>
      %26 = arith.mulf %20, %25 : vector<8x1xf32>
      %27 = arith.mulf %14, %26 : vector<8x1xf32>
      %28 = arith.subf %21, %27 : vector<8x1xf32>
      %29 = vector.broadcast %26 : vector<8x1xf32> to vector<8x384xf32>
      %30 = arith.mulf %11, %29 : vector<8x384xf32>
      %31 = vector.broadcast %28 : vector<8x1xf32> to vector<8x384xf32>
      %32 = arith.addf %30, %31 : vector<8x384xf32>
      %cst_19 = arith.constant 0.000000e+00 : f32
      %33 = vector.broadcast %cst_19 : f32 to vector<8x384xf32>
      %34 = arith.maximumf %32, %33 : vector<8x384xf32>
      %c0_20 = arith.constant 0 : index
      %c0_21 = arith.constant 0 : index
      %35 = vector.load %arg5[%c0_20, %c0_21] : memref<8x8xbf16, #tpu.memory_space<vmem>>, vector<8x8xbf16>
      %36 = arith.truncf %34 : vector<8x384xf32> to vector<8x384xbf16>
      %cst_22 = arith.constant dense<0.000000e+00> : vector<8x384xf32>
      %37 = tpu.matmul %35, %36, %cst_22 {dimension_numbers = #tpu.dot_dimension_numbers<[1], [0], [0], [1], [0, 0, 1, 1], [], []>} : vector<8x8xbf16>, vector<8x384xbf16>, vector<8x384xf32> -> vector<8x384xf32>
      %38 = vector.broadcast %22 : vector<8x1xf32> to vector<8x384xf32>
      %39 = arith.addf %37, %38 : vector<8x384xf32>
      %c0_23 = arith.constant 0 : index
      %c0_24 = arith.constant 0 : index
      %40 = vector.load %arg7[%c0_23, %c0_24] : memref<8x384xf32, #tpu.memory_space<vmem>>, vector<8x384xf32>
      tpu.vector_store %arg7[%c0_23, %c0_24], %39 {strides = array<i32>} : memref<8x384xf32, #tpu.memory_space<vmem>>, vector<8x384xf32>,
    } else {
    }
    return
  }
  func.func @transform_0(%arg0: i32, %arg1: i32) -> (i32, i32) {
    %c0_i32 = arith.constant 0 : i32
    %c0_i32_0 = arith.constant 0 : i32
    return %c0_i32, %arg1 : i32, i32
  }
  func.func @transform_1(%arg0: i32, %arg1: i32) -> (i32, i32) {
    %c0_i32 = arith.constant 0 : i32
    %c0_i32_0 = arith.constant 0 : i32
    %c0_i32_1 = arith.constant 0 : i32
    return %c0_i32, %c0_i32_0 : i32, i32
  }
  func.func @transform_2(%arg0: i32, %arg1: i32) -> (i32, i32) {
    %c0_i32 = arith.constant 0 : i32
    %c0_i32_0 = arith.constant 0 : i32
    %c0_i32_1 = arith.constant 0 : i32
    return %c0_i32, %c0_i32_0 : i32, i32
  }
  func.func @transform_3(%arg0: i32, %arg1: i32) -> (i32, i32) {
    %c0_i32 = arith.constant 0 : i32
    %c0_i32_0 = arith.constant 0 : i32
    %c0_i32_1 = arith.constant 0 : i32
    return %c0_i32, %c0_i32_0 : i32, i32
  }
  func.func @transform_4(%arg0: i32, %arg1: i32) -> (i32, i32) {
    %c0_i32 = arith.constant 0 : i32
    %c0_i32_0 = arith.constant 0 : i32
    %c0_i32_1 = arith.constant 0 : i32
    return %c0_i32, %c0_i32_0 : i32, i32
  }
  func.func @transform_5(%arg0: i32, %arg1: i32) -> (i32, i32) {
    %0 = arith.muli %arg1, %arg0 : i32
    %c0_i32 = arith.constant 0 : i32
    %c0_i32_0 = arith.constant 0 : i32
    return %c0_i32, %0 : i32, i32
  }
}

</mosaic_0001>

<llo_original>
// kernel: tpu_custom_call.1
$region0: #{tpu_custom_call.1}
  #allocation0 [shape = 'u32[]', space=smem, size = 0x4, offset = 0x4, fixed_abs, tag = 'smem constant byte address 0x4 - core index']
  #allocation1 [shape = 'u32[144,128]{1,0:T(1,128)}', space=vmem, size = 0x12000, scoped, tag = 'internal scratch']
  #allocation2 [shape = 'f32[8,1]{1,0:T(8,128)}', space=vmem, size = 0x1000, scoped, tag = 'scratch operand']
  #allocation3 [shape = 'f32[8,1]{1,0:T(8,128)}', space=vmem, size = 0x1000, scoped, tag = 'scratch operand']
  %s0 = inlined_call_operand.vmem [shape: bf16[4,768], index: 0, kind: input, shape index: {}]
  %s1 = inlined_call_operand.hbm [shape: bf16[384,384], index: 1, kind: input, shape index: {}]
  %s2 = inlined_call_operand.vmem [shape: bf16[8,4], index: 2, kind: input, shape index: {}]
  %s3 = inlined_call_operand.vmem [shape: bf16[8,8], index: 3, kind: input, shape index: {}]
  %s4 = inlined_call_operand.vmem [shape: f32[8,3], index: 4, kind: input, shape index: {}]
  %s5 = inlined_call_operand.hbm [shape: f32[8,768], index: 5, kind: output, shape index: {}]
  %s6 = sld [smem:[#allocation0]]
  $region69: #{tpu_custom_call.1} parent=0
    _
  %s8 = ssub.s32 1, %s6
  %s9 = scalar_select 0, %s8, %s6
  $region1: #{tpu_custom_call.1} parent=0
    #allocation4 [shape = 'u8[294912]{0}', space=vmem, size = 0x48000, scoped, tag = 'input window, operand 1, single buffered']
    #allocation5 [shape = 's32[2]{0}', space=sflag, size = 0x8, scoped, tag = 'scoped memory for tpu_custom_call.1']
    #allocation6 [shape = 's32[2]{0}', space=sflag, size = 0x8, scoped, tag = 'scoped memory for tpu_custom_call.1']
    #allocation7 [shape = 'u8[24576]{0}', space=vmem, size = 0x6000, scoped, tag = 'output window, operand 0']
    %10 = vsyncpa [#allocation5], 0
    %11 = vsyncpa [#allocation6], 0
    %s12 = scalar_lea.sflag [#allocation6], 1
    %13 = vsyncpa %s12, 0
    loop: start=0, step=1, limit=6
    $region2: #{tpu_custom_call.1} parent=1 // loop_pre_header
      _
    $region3: #{tpu_custom_call.1} parent=1 // loop_header
      %s15 = sphi 0, %s19
      %p16 = scmp.ge.s32.totalorder %s15, 6
      %s22 = sphi 0, %s34
      %s23 = sphi 0, %s30
      %s24 = sphi 0, %s22
      %s25 = sphi 0, %s23
      %s26 = sphi 0, %s24
      %s27 = sphi 0, %s25
      %s37 = sphi 0, %s39
      %s40 = sphi 0, %s37
      %s41 = sphi 0, %s40
      %s57 = sphi 0, %s41
      %s61 = sphi 0, %s61
      %s63 = sphi 0, %s61
      %s64 = sphi 0, %s63
      %s78 = sphi 0, %s64
      %s82 = sphi 0, %s82
      %s84 = sphi 0, %s82
      %s85 = sphi 0, %s84
      %s99 = sphi 0, %s85
      %s103 = sphi 0, %s103
      %s105 = sphi 0, %s103
      %s106 = sphi 0, %s105
      %s120 = sphi 0, %s106
      %s124 = sphi 0, %s124
      %s126 = sphi 0, %s124
      %s127 = sphi 0, %s126
      %s141 = sphi 0, %s127
      %s149 = sphi 0, %s151
      %s152 = sphi 0, %s149
      %s153 = sphi 0, %s152
      %s169 = sphi 0, %s153
    $region4: #{tpu_custom_call.1} parent=1 // loop_header_branch
      %18 = sbr.rel (%p16) target = $region8
    $region5: #{tpu_custom_call.1} parent=1 // loop_body
      %s20 = ssub.s32 %s15, 1
      %s21 = ssub.s32 %s15, 2
      %s28 = sadd.s32 1, %s23
      %p29 = scmp.ge.s32.totalorder %s28, 2
      %s30 = scalar_select %p29, 0, %s28
      %s31 = sadd.s32 1, %s22
      %s32 = scalar_select %p29, %s31, %s22
      %p33 = scmp.ge.s32.totalorder %s32, 2
      %s34 = scalar_select %p33, 0, %s32
      %s35 = ssub.s32 %s23, %s30
      %p36 = scmp.eq.s32.totalorder %s35, 0
      %s38 = sadd.s32 %s37, 1
      %s39 = scalar_select %p36, %s37, %s38
      %p42 = pneg %p36
      %p43 = scmp.eq.s32.totalorder %s15, 3
      %p44 = por %p42, %p43
      %p45 = scmp.ne.s32.totalorder %s37, %s40
      %p46 = scmp.eq.s32.totalorder %s15, 0
      %p47 = por %p45, %p46
      %p48 = scmp.ne.s32.totalorder %s37, %s40
      %p49 = scmp.eq.s32.totalorder %s20, 3
      %p50 = por %p48, %p49
      %p51 = scmp.ne.s32.totalorder %s40, %s41
      %p52 = scmp.eq.s32.totalorder %s20, 0
      %p53 = por %p51, %p52
      %p54 = scmp.ne.s32.totalorder %s40, %s41
      %p55 = scmp.eq.s32.totalorder %s21, 3
      %p56 = por %p54, %p55
      %p58 = scmp.ne.s32.totalorder %s41, %s57
      %p59 = scmp.eq.s32.totalorder %s21, 0
      %p60 = por %p58, %p59
      %s62 = sadd.s32 %s61, 1
      %p65 = scmp.eq.s32.totalorder %s15, 3
      %p66 = scmp.ne.s32.totalorder %s61, %s63
      %p67 = scmp.eq.s32.totalorder %s15, 0
      %p68 = por %p66, %p67
      %p69 = scmp.ne.s32.totalorder %s61, %s63
      %p70 = scmp.eq.s32.totalorder %s20, 3
      %p71 = por %p69, %p70
      %p72 = scmp.ne.s32.totalorder %s63, %s64
      %p73 = scmp.eq.s32.totalorder %s20, 0
      %p74 = por %p72, %p73
      %p75 = scmp.ne.s32.totalorder %s63, %s64
      %p76 = scmp.eq.s32.totalorder %s21, 3
      %p77 = por %p75, %p76
      %p79 = scmp.ne.s32.totalorder %s64, %s78
      %p80 = scmp.eq.s32.totalorder %s21, 0
      %p81 = por %p79, %p80
      %s83 = sadd.s32 %s82, 1
      %p86 = scmp.eq.s32.totalorder %s15, 3
      %p87 = scmp.ne.s32.totalorder %s82, %s84
      %p88 = scmp.eq.s32.totalorder %s15, 0
      %p89 = por %p87, %p88
      %p90 = scmp.ne.s32.totalorder %s82, %s84
      %p91 = scmp.eq.s32.totalorder %s20, 3
      %p92 = por %p90, %p91
      %p93 = scmp.ne.s32.totalorder %s84, %s85
      %p94 = scmp.eq.s32.totalorder %s20, 0
      %p95 = por %p93, %p94
      %p96 = scmp.ne.s32.totalorder %s84, %s85
      %p97 = scmp.eq.s32.totalorder %s21, 3
      %p98 = por %p96, %p97
      %p100 = scmp.ne.s32.totalorder %s85, %s99
      %p101 = scmp.eq.s32.totalorder %s21, 0
      %p102 = por %p100, %p101
      %s104 = sadd.s32 %s103, 1
      %p107 = scmp.eq.s32.totalorder %s15, 3
      %p108 = scmp.ne.s32.totalorder %s103, %s105
      %p109 = scmp.eq.s32.totalorder %s15, 0
      %p110 = por %p108, %p109
      %p111 = scmp.ne.s32.totalorder %s103, %s105
      %p112 = scmp.eq.s32.totalorder %s20, 3
      %p113 = por %p111, %p112
      %p114 = scmp.ne.s32.totalorder %s105, %s106
      %p115 = scmp.eq.s32.totalorder %s20, 0
      %p116 = por %p114, %p115
      %p117 = scmp.ne.s32.totalorder %s105, %s106
      %p118 = scmp.eq.s32.totalorder %s21, 3
      %p119 = por %p117, %p118
      %p121 = scmp.ne.s32.totalorder %s106, %s120
      %p122 = scmp.eq.s32.totalorder %s21, 0
      %p123 = por %p121, %p122
      %s125 = sadd.s32 %s124, 1
      %p128 = scmp.eq.s32.totalorder %s15, 3
      %p129 = scmp.ne.s32.totalorder %s124, %s126
      %p130 = scmp.eq.s32.totalorder %s15, 0
      %p131 = por %p129, %p130
      %p132 = scmp.ne.s32.totalorder %s124, %s126
      %p133 = scmp.eq.s32.totalorder %s20, 3
      %p134 = por %p132, %p133
      %p135 = scmp.ne.s32.totalorder %s126, %s127
      %p136 = scmp.eq.s32.totalorder %s20, 0
      %p137 = por %p135, %p136
      %p138 = scmp.ne.s32.totalorder %s126, %s127
      %p139 = scmp.eq.s32.totalorder %s21, 3
      %p140 = por %p138, %p139
      %p142 = scmp.ne.s32.totalorder %s127, %s141
      %p143 = scmp.eq.s32.totalorder %s21, 0
      %p144 = por %p142, %p143
      %s145 = smul.u32 %s23, %s22
      %s146 = smul.u32 %s30, %s34
      %s147 = ssub.s32 %s145, %s146
      %p148 = scmp.eq.s32.totalorder %s147, 0
      %s150 = sadd.s32 %s149, 1
      %s151 = scalar_select %p148, %s149, %s150
      %p154 = pneg %p148
      %p155 = scmp.eq.s32.totalorder %s15, 3
      %p156 = por %p154, %p155
      %p157 = scmp.ne.s32.totalorder %s149, %s152
      %p158 = scmp.eq.s32.totalorder %s15, 0
      %p159 = por %p157, %p158
      %p160 = scmp.ne.s32.totalorder %s149, %s152
      %p161 = scmp.eq.s32.totalorder %s20, 3
      %p162 = por %p160, %p161
      %p163 = scmp.ne.s32.totalorder %s152, %s153
      %p164 = scmp.eq.s32.totalorder %s20, 0
      %p165 = por %p163, %p164
      %p166 = scmp.ne.s32.totalorder %s152, %s153
      %p167 = scmp.eq.s32.totalorder %s21, 3
      %p168 = por %p166, %p167
      %p170 = scmp.ne.s32.totalorder %s153, %s169
      %p171 = scmp.eq.s32.totalorder %s21, 0
      %p172 = por %p170, %p171
      %p173 = scmp.le.s32.totalorder 1, %s15
      %p174 = scmp.lt.s32.totalorder %s15, 5
      %p175 = pnand %p173, %p174
      %p176 = pneg %p175
      // Predicated region
      $region9: #{tpu_custom_call.1} parent=5 // pred_check
        _
      $region10: #{tpu_custom_call.1} parent=5 // pred_check_branch
        %178 = sbr.rel (%p175) target = $region12
      $region11: #{tpu_custom_call.1} parent=5 // pred_region
        %s179 = ssub.s32 %s15, 1
        // Predicated region
        $region13: #{tpu_custom_call.1} parent=11 // pred_check
          %p180 = pneg %p74
        $region14: #{tpu_custom_call.1} parent=11 // pred_check_branch
          %182 = sbr.rel (%p180) target = $region16
        $region15: #{tpu_custom_call.1} parent=11 // pred_region
          %s184 = ssub.s32 9216, 9216
          %185 = vsyncadd [#allocation5], %s184
          %s186 = sshll.u32 [#allocation4], 4
          %s187 = int_to_ptr.vmem [resolvable:$true] %s186
          %192 = dma.hbm_to_vmem [thread:$0]  %s1, 9216, %s187, [#allocation5], 192, 192, 12
        $region16: #{tpu_custom_call.1} parent=11 // pred_fallthru
          _
        // Predicated region
        $region17: #{tpu_custom_call.1} parent=11 // pred_check
          %p193 = pneg %p95
        $region18: #{tpu_custom_call.1} parent=11 // pred_check_branch
          %195 = sbr.rel (%p193) target = $region20
        $region19: #{tpu_custom_call.1} parent=11 // pred_region
          _
        $region20: #{tpu_custom_call.1} parent=11 // pred_fallthru
          _
        // Predicated region
        $region21: #{tpu_custom_call.1} parent=11 // pred_check
          %p196 = pneg %p116
        $region22: #{tpu_custom_call.1} parent=11 // pred_check_branch
          %198 = sbr.rel (%p196) target = $region24
        $region23: #{tpu_custom_call.1} parent=11 // pred_region
          _
        $region24: #{tpu_custom_call.1} parent=11 // pred_fallthru
          _
        // Predicated region
        $region25: #{tpu_custom_call.1} parent=11 // pred_check
          %p199 = pneg %p137
        $region26: #{tpu_custom_call.1} parent=11 // pred_check_branch
          %201 = sbr.rel (%p199) target = $region28
        $region27: #{tpu_custom_call.1} parent=11 // pred_region
          _
        $region28: #{tpu_custom_call.1} parent=11 // pred_fallthru
          _
      $region12: #{tpu_custom_call.1} parent=5 // pred_fallthru
        _
      %p202 = scmp.lt.s32.totalorder %s15, 4
      // Predicated region
      $region29: #{tpu_custom_call.1} parent=5 // pred_check
        %p203 = pneg %p202
      $region30: #{tpu_custom_call.1} parent=5 // pred_check_branch
        %205 = sbr.rel (%p203) target = $region32
      $region31: #{tpu_custom_call.1} parent=5 // pred_region
        // Predicated region
        $region33: #{tpu_custom_call.1} parent=31 // pred_check
          %p206 = pneg %p47
        $region34: #{tpu_custom_call.1} parent=31 // pred_check_branch
          %208 = sbr.rel (%p206) target = $region36
        $region35: #{tpu_custom_call.1} parent=31 // pred_region
          %s209 = smul.u32 3, %s23
          %p210 = scmp.lt.s32.totalorder %s209, 5
          %s211 = scalar_select %p210, %s209, 5
          %s212 = smul.addr %s211, 2
          %s213 = scalar_lea.vmem %s0, %s212
          %s214 = smul.u32 3, %s23
        $region36: #{tpu_custom_call.1} parent=31 // pred_fallthru
          _
      $region32: #{tpu_custom_call.1} parent=5 // pred_fallthru
        _
      %p215 = scmp.le.s32.totalorder 1, %s15
      %p216 = scmp.lt.s32.totalorder %s15, 5
      %p217 = pnand %p215, %p216
      %p218 = pneg %p217
      // Predicated region
      $region37: #{tpu_custom_call.1} parent=5 // pred_check
        _
      $region38: #{tpu_custom_call.1} parent=5 // pred_check_branch
        %220 = sbr.rel (%p217) target = $region40
      $region39: #{tpu_custom_call.1} parent=5 // pred_region
        %s221 = ssub.s32 %s15, 1
        // Predicated region
        $region41: #{tpu_custom_call.1} parent=39 // pred_check
          %p222 = pneg %p74
        $region42: #{tpu_custom_call.1} parent=39 // pred_check_branch
          %224 = sbr.rel (%p222) target = $region44
        $region43: #{tpu_custom_call.1} parent=39 // pred_region
          %225 = dma.done [#allocation5], 9216
        $region44: #{tpu_custom_call.1} parent=39 // pred_fallthru
          _
        %s226 = smul.u32 3, %s25
        %p227 = scmp.lt.s32.totalorder %s226, 5
        %s228 = scalar_select %p227, %s226, 5
        %s229 = smul.addr %s228, 2
        %s230 = scalar_lea.vmem %s0, %s229
        %p231 = pneg %p53
        %p232 = pneg %p50
        %p233 = pneg %p74
        %p234 = pneg %p71
        %p235 = pneg %p95
        %p236 = pneg %p92
        %p237 = pneg %p116
        %p238 = pneg %p113
        %p239 = pneg %p137
        %p240 = pneg %p134
        %p241 = pneg %p165
        %p242 = pneg %p162
        %s243 = sand.u32 %s152, 1
        %s244 = scalar_lea.sflag [#allocation6], %s243
        %s245 = sand.u32 %s152, 1
        %s246 = smul.addr %s245, 24
        %s247 = scalar_lea.vmem [#allocation7], %s246
        %s248 = smul.u32 3, %s25
        %p249 = scmp.lt.s32.totalorder %s248, 5
        %s250 = scalar_select %p249, %s248, 5
        %s251 = smul.addr %s250, 2
        %s252 = scalar_lea.vmem %s0, %s251
        %s253 = smul.u32 3, %s25
        %s254 = smul.u32 %s25, %s24
        %s255 = smul.u32 3, %s254
        %p257 = scmp.eq.s32.totalorder %s24, 0
        // Predicated region
        $region45: #{tpu_custom_call.1} parent=39 // pred_check
          %p258 = pneg %p257
        $region46: #{tpu_custom_call.1} parent=39 // pred_check_branch
          %260 = sbr.rel (%p258) target = $region48
        $region47: #{tpu_custom_call.1} parent=39 // pred_region
          %p261 = scmp.eq.s32.totalorder %s25, 0
          // Predicated region
          $region49: #{tpu_custom_call.1} parent=47 // pred_check
            %p262 = pneg %p261
          $region50: #{tpu_custom_call.1} parent=47 // pred_check_branch
            %264 = sbr.rel (%p262) target = $region52
          $region51: #{tpu_custom_call.1} parent=47 // pred_region
            %vm265 = vcmask 7168
            %266 = vst.msk [vmem:[#allocation2] sm:$0xff] %vm265, 0.0
            %267 = vst.msk [vmem:[#allocation3] sm:$0xff] %vm265, 0.0
          $region52: #{tpu_custom_call.1} parent=47 // pred_fallthru
            _
          %v268 = vld [vmem:[%s252] sm:$0x3f]
          %v269 = vld [vmem:[#allocation4] sm:$0xff]
          %v270 = vld [vmem:[#allocation4 + $0x8] sm:$0xf]
          %v271 = vld [vmem:[#allocation4 + $0xc] sm:$0xff]
          %v272 = vld [vmem:[#allocation4 + $0x14] sm:$0xf]
          %v273 = vld [vmem:[#allocation4 + $0x18] sm:$0xff]
          %v274 = vld [vmem:[#allocation4 + $0x20] sm:$0xf]
          %v275 = vld [vmem:[#allocation4 + $0x24] sm:$0xff]
          %v276 = vld [vmem:[#allocation4 + $0x2c] sm:$0xf]
          %v277 = vld [vmem:[#allocation4 + $0x30] sm:$0xff]
          %v278 = vld [vmem:[#allocation4 + $0x38] sm:$0xf]
          %v279 = vld [vmem:[#allocation4 + $0x3c] sm:$0xff]
          %v280 = vld [vmem:[#allocation4 + $0x44] sm:$0xf]
          %v281 = vld [vmem:[#allocation4 + $0x48] sm:$0xff]
          %v282 = vld [vmem:[#allocation4 + $0x50] sm:$0xf]
          %v283 = vld [vmem:[#allocation4 + $0x54] sm:$0xff]
          %v284 = vld [vmem:[#allocation4 + $0x5c] sm:$0xf]
          %v285 = vld [vmem:[#allocation4 + $0x60] sm:$0xff]
          %v286 = vld [vmem:[#allocation4 + $0x68] sm:$0xf]
          %v287 = vld [vmem:[#allocation4 + $0x6c] sm:$0xff]
          %v288 = vld [vmem:[#allocation4 + $0x74] sm:$0xf]
          %v289 = vld [vmem:[#allocation4 + $0x78] sm:$0xff]
          %v290 = vld [vmem:[#allocation4 + $0x80] sm:$0xf]
          %v291 = vld [vmem:[#allocation4 + $0x84] sm:$0xff]
          %v292 = vld [vmem:[#allocation4 + $0x8c] sm:$0xf]
          %v293 = vld [vmem:[#allocation4 + $0x90] sm:$0xff]
          %v294 = vld [vmem:[#allocation4 + $0x98] sm:$0xf]
          %v295 = vld [vmem:[#allocation4 + $0x9c] sm:$0xff]
          %v296 = vld [vmem:[#allocation4 + $0xa4] sm:$0xf]
          %v297 = vld [vmem:[#allocation4 + $0xa8] sm:$0xff]
          %v298 = vld [vmem:[#allocation4 + $0xb0] sm:$0xf]
          %v299 = vld [vmem:[#allocation4 + $0xb4] sm:$0xff]
          %v300 = vld [vmem:[#allocation4 + $0xbc] sm:$0xf]
          %v301 = vld [vmem:[#allocation4 + $0xc0] sm:$0xff]
          %v302 = vld [vmem:[#allocation4 + $0xc8] sm:$0xf]
          %v303 = vld [vmem:[#allocation4 + $0xcc] sm:$0xff]
          %v304 = vld [vmem:[#allocation4 + $0xd4] sm:$0xf]
          %v305 = vld [vmem:[#allocation4 + $0xd8] sm:$0xff]
          %v306 = vld [vmem:[#allocation4 + $0xe0] sm:$0xf]
          %v307 = vld [vmem:[#allocation4 + $0xe4] sm:$0xff]
          %v308 = vld [vmem:[#allocation4 + $0xec] sm:$0xf]
          %v309 = vld [vmem:[#allocation4 + $0xf0] sm:$0xff]
          %v310 = vld [vmem:[#allocation4 + $0xf8] sm:$0xf]
          %v311 = vld [vmem:[#allocation4 + $0xfc] sm:$0xff]
          %v312 = vld [vmem:[#allocation4 + $0x104] sm:$0xf]
          %v313 = vld [vmem:[#allocation4 + $0x108] sm:$0xff]
          %v314 = vld [vmem:[#allocation4 + $0x110] sm:$0xf]
          %v315 = vld [vmem:[#allocation4 + $0x114] sm:$0xff]
          %v316 = vld [vmem:[#allocation4 + $0x11c] sm:$0xf]
          %v317 = vld [vmem:[#allocation4 + $0x120] sm:$0xff]
          %v318 = vld [vmem:[#allocation4 + $0x128] sm:$0xf]
          %v319 = vld [vmem:[#allocation4 + $0x12c] sm:$0xff]
          %v320 = vld [vmem:[#allocation4 + $0x134] sm:$0xf]
          %v321 = vld [vmem:[#allocation4 + $0x138] sm:$0xff]
          %v322 = vld [vmem:[#allocation4 + $0x140] sm:$0xf]
          %v323 = vld [vmem:[#allocation4 + $0x144] sm:$0xff]
          %v324 = vld [vmem:[#allocation4 + $0x14c] sm:$0xf]
          %v325 = vld [vmem:[#allocation4 + $0x150] sm:$0xff]
          %v326 = vld [vmem:[#allocation4 + $0x158] sm:$0xf]
          %v327 = vld [vmem:[#allocation4 + $0x15c] sm:$0xff]
          %v328 = vld [vmem:[#allocation4 + $0x164] sm:$0xf]
          %v329 = vld [vmem:[#allocation4 + $0x168] sm:$0xff]
          %v330 = vld [vmem:[#allocation4 + $0x170] sm:$0xf]
          %v331 = vld [vmem:[#allocation4 + $0x174] sm:$0xff]
          %v332 = vld [vmem:[#allocation4 + $0x17c] sm:$0xf]
          %v333 = vld [vmem:[#allocation4 + $0x180] sm:$0xff]
          %v334 = vld [vmem:[#allocation4 + $0x188] sm:$0xf]
          %v335 = vld [vmem:[#allocation4 + $0x18c] sm:$0xff]
          %v336 = vld [vmem:[#allocation4 + $0x194] sm:$0xf]
          %v337 = vld [vmem:[#allocation4 + $0x198] sm:$0xff]
          %v338 = vld [vmem:[#allocation4 + $0x1a0] sm:$0xf]
          %v339 = vld [vmem:[#allocation4 + $0x1a4] sm:$0xff]
          %v340 = vld [vmem:[#allocation4 + $0x1ac] sm:$0xf]
          %v341 = vld [vmem:[#allocation4 + $0x1b0] sm:$0xff]
          %v342 = vld [vmem:[#allocation4 + $0x1b8] sm:$0xf]
          %v343 = vld [vmem:[#allocation4 + $0x1bc] sm:$0xff]
          %v344 = vld [vmem:[#allocation4 + $0x1c4] sm:$0xf]
          %v345 = vld [vmem:[#allocation4 + $0x1c8] sm:$0xff]
          %v346 = vld [vmem:[#allocation4 + $0x1d0] sm:$0xf]
          %v347 = vld [vmem:[#allocation4 + $0x1d4] sm:$0xff]
          %v348 = vld [vmem:[#allocation4 + $0x1dc] sm:$0xf]
          %v349 = vld [vmem:[#allocation4 + $0x1e0] sm:$0xff]
          %v350 = vld [vmem:[#allocation4 + $0x1e8] sm:$0xf]
          %v351 = vld [vmem:[#allocation4 + $0x1ec] sm:$0xff]
          %v352 = vld [vmem:[#allocation4 + $0x1f4] sm:$0xf]
          %v353 = vld [vmem:[#allocation4 + $0x1f8] sm:$0xff]
          %v354 = vld [vmem:[#allocation4 + $0x200] sm:$0xf]
          %v355 = vld [vmem:[#allocation4 + $0x204] sm:$0xff]
          %v356 = vld [vmem:[#allocation4 + $0x20c] sm:$0xf]
          %v357 = vld [vmem:[#allocation4 + $0x210] sm:$0xff]
          %v358 = vld [vmem:[#allocation4 + $0x218] sm:$0xf]
          %v359 = vld [vmem:[#allocation4 + $0x21c] sm:$0xff]
          %v360 = vld [vmem:[#allocation4 + $0x224] sm:$0xf]
          %v361 = vld [vmem:[#allocation4 + $0x228] sm:$0xff]
          %v362 = vld [vmem:[#allocation4 + $0x230] sm:$0xf]
          %v363 = vld [vmem:[#allocation4 + $0x234] sm:$0xff]
          %v364 = vld [vmem:[#allocation4 + $0x23c] sm:$0xf]
          %v366 = vcombine.high %v268, %v268
          %v368 = vunpack.c.l.s4 1983009808
          %v369 = vunpack.c.0.s8 %v368
          %v370 = vlaneseq
          %v371 = vshrl.u32 %v370, 7
          %v372 = vsub.s32 %v369, %v371
          %v373 = vrot.slane %v268, %v372
          %v375 = vunpack.c.l.s4 1983009808
          %v376 = vunpack.c.0.s8 %v375
          %v377 = vlaneseq
          %v378 = vshrl.u32 %v377, 7
          %v379 = vsub.s32 %v376, %v378
          %v380 = vrot.slane %v366, %v379
          %v381 = vcombine.high %v373, %v373
          %v481 = vunpack.c.l.b16 %v269
          %v482 = vunpack.c.h.b16 %v269
          %v483 = vunpack.c.l.b16 %v270
          %v484 = vunpack.c.l.b16 %v271
          %v485 = vunpack.c.h.b16 %v271
          %v486 = vunpack.c.l.b16 %v272
          %v487 = vunpack.c.l.b16 %v273
          %v488 = vunpack.c.h.b16 %v273
          %v489 = vunpack.c.l.b16 %v274
          %v490 = vunpack.c.l.b16 %v275
          %v491 = vunpack.c.h.b16 %v275
          %v492 = vunpack.c.l.b16 %v276
          %v493 = vunpack.c.l.b16 %v277
          %v494 = vunpack.c.h.b16 %v277
          %v495 = vunpack.c.l.b16 %v278
          %v496 = vunpack.c.l.b16 %v279
          %v497 = vunpack.c.h.b16 %v279
          %v498 = vunpack.c.l.b16 %v280
          %v499 = vunpack.c.l.b16 %v281
          %v500 = vunpack.c.h.b16 %v281
          %v501 = vunpack.c.l.b16 %v282
          %v502 = vunpack.c.l.b16 %v283
          %v503 = vunpack.c.h.b16 %v283
          %v504 = vunpack.c.l.b16 %v284
          %v505 = vunpack.c.l.b16 %v285
          %v506 = vunpack.c.h.b16 %v285
          %v507 = vunpack.c.l.b16 %v286
          %v508 = vunpack.c.l.b16 %v287
          %v509 = vunpack.c.h.b16 %v287
          %v510 = vunpack.c.l.b16 %v288
          %v511 = vunpack.c.l.b16 %v289
          %v512 = vunpack.c.h.b16 %v289
          %v513 = vunpack.c.l.b16 %v290
          %v514 = vunpack.c.l.b16 %v291
          %v515 = vunpack.c.h.b16 %v291
          %v516 = vunpack.c.l.b16 %v292
          %v517 = vunpack.c.l.b16 %v293
          %v518 = vunpack.c.h.b16 %v293
          %v519 = vunpack.c.l.b16 %v294
          %v520 = vunpack.c.l.b16 %v295
          %v521 = vunpack.c.h.b16 %v295
          %v522 = vunpack.c.l.b16 %v296
          %v523 = vunpack.c.l.b16 %v297
          %v524 = vunpack.c.h.b16 %v297
          %v525 = vunpack.c.l.b16 %v298
          %v526 = vunpack.c.l.b16 %v299
          %v527 = vunpack.c.h.b16 %v299
          %v528 = vunpack.c.l.b16 %v300
          %v529 = vunpack.c.l.b16 %v301
          %v530 = vunpack.c.h.b16 %v301
          %v531 = vunpack.c.l.b16 %v302
          %v532 = vunpack.c.l.b16 %v303
          %v533 = vunpack.c.h.b16 %v303
          %v534 = vunpack.c.l.b16 %v304
          %v535 = vunpack.c.l.b16 %v305
          %v536 = vunpack.c.h.b16 %v305
          %v537 = vunpack.c.l.b16 %v306
          %v538 = vunpack.c.l.b16 %v307
          %v539 = vunpack.c.h.b16 %v307
          %v540 = vunpack.c.l.b16 %v308
          %v541 = vunpack.c.l.b16 %v309
          %v542 = vunpack.c.h.b16 %v309
          %v543 = vunpack.c.l.b16 %v310
          %v544 = vunpack.c.l.b16 %v311
          %v545 = vunpack.c.h.b16 %v311
          %v546 = vunpack.c.l.b16 %v312
          %v547 = vunpack.c.l.b16 %v313
          %v548 = vunpack.c.h.b16 %v313
          %v549 = vunpack.c.l.b16 %v314
          %v550 = vunpack.c.l.b16 %v315
          %v551 = vunpack.c.h.b16 %v315
          %v552 = vunpack.c.l.b16 %v316
          %v553 = vunpack.c.l.b16 %v317
          %v554 = vunpack.c.h.b16 %v317
          %v555 = vunpack.c.l.b16 %v318
          %v556 = vunpack.c.l.b16 %v319
          %v557 = vunpack.c.h.b16 %v319
          %v558 = vunpack.c.l.b16 %v320
          %v559 = vunpack.c.l.b16 %v321
          %v560 = vunpack.c.h.b16 %v321
          %v561 = vunpack.c.l.b16 %v322
          %v562 = vunpack.c.l.b16 %v323
          %v563 = vunpack.c.h.b16 %v323
          %v564 = vunpack.c.l.b16 %v324
          %v565 = vunpack.c.l.b16 %v325
          %v566 = vunpack.c.h.b16 %v325
          %v567 = vunpack.c.l.b16 %v326
          %v568 = vunpack.c.l.b16 %v327
          %v569 = vunpack.c.h.b16 %v327
          %v570 = vunpack.c.l.b16 %v328
          %v571 = vunpack.c.l.b16 %v329
          %v572 = vunpack.c.h.b16 %v329
          %v573 = vunpack.c.l.b16 %v330
          %v574 = vunpack.c.l.b16 %v331
          %v575 = vunpack.c.h.b16 %v331
          %v576 = vunpack.c.l.b16 %v332
          %v577 = vunpack.c.l.b16 %v333
          %v578 = vunpack.c.h.b16 %v333
          %v579 = vunpack.c.l.b16 %v334
          %v580 = vunpack.c.l.b16 %v335
          %v581 = vunpack.c.h.b16 %v335
          %v582 = vunpack.c.l.b16 %v336
          %v583 = vunpack.c.l.b16 %v337
          %v584 = vunpack.c.h.b16 %v337
          %v585 = vunpack.c.l.b16 %v338
          %v586 = vunpack.c.l.b16 %v339
          %v587 = vunpack.c.h.b16 %v339
          %v588 = vunpack.c.l.b16 %v340
          %v589 = vunpack.c.l.b16 %v341
          %v590 = vunpack.c.h.b16 %v341
          %v591 = vunpack.c.l.b16 %v342
          %v592 = vunpack.c.l.b16 %v343
          %v593 = vunpack.c.h.b16 %v343
          %v594 = vunpack.c.l.b16 %v344
          %v595 = vunpack.c.l.b16 %v345
          %v596 = vunpack.c.h.b16 %v345
          %v597 = vunpack.c.l.b16 %v346
          %v598 = vunpack.c.l.b16 %v347
          %v599 = vunpack.c.h.b16 %v347
          %v600 = vunpack.c.l.b16 %v348
          %v601 = vunpack.c.l.b16 %v349
          %v602 = vunpack.c.h.b16 %v349
          %v603 = vunpack.c.l.b16 %v350
          %v604 = vunpack.c.l.b16 %v351
          %v605 = vunpack.c.h.b16 %v351
          %v606 = vunpack.c.l.b16 %v352
          %v607 = vunpack.c.l.b16 %v353
          %v608 = vunpack.c.h.b16 %v353
          %v609 = vunpack.c.l.b16 %v354
          %v610 = vunpack.c.l.b16 %v355
          %v611 = vunpack.c.h.b16 %v355
          %v612 = vunpack.c.l.b16 %v356
          %v613 = vunpack.c.l.b16 %v357
          %v614 = vunpack.c.h.b16 %v357
          %v615 = vunpack.c.l.b16 %v358
          %v616 = vunpack.c.l.b16 %v359
          %v617 = vunpack.c.h.b16 %v359
          %v618 = vunpack.c.l.b16 %v360
          %v619 = vunpack.c.l.b16 %v361
          %v620 = vunpack.c.h.b16 %v361
          %v621 = vunpack.c.l.b16 %v362
          %v622 = vunpack.c.l.b16 %v363
          %v623 = vunpack.c.h.b16 %v363
          %v624 = vunpack.c.l.b16 %v364
          %v625 = vpack.c.b16 %v484, %v481
          %v626 = vpack.c.b16 %v485, %v482
          %v627 = vpack.c.b16 %v486, %v483
          %v628 = vpack.c.b16 %v490, %v487
          %v629 = vpack.c.b16 %v491, %v488
          %v630 = vpack.c.b16 %v492, %v489
          %v631 = vpack.c.b16 %v496, %v493
          %v632 = vpack.c.b16 %v497, %v494
          %v633 = vpack.c.b16 %v498, %v495
          %v634 = vpack.c.b16 %v502, %v499
          %v635 = vpack.c.b16 %v503, %v500
          %v636 = vpack.c.b16 %v504, %v501
          %v637 = vpack.c.b16 %v508, %v505
          %v638 = vpack.c.b16 %v509, %v506
          %v639 = vpack.c.b16 %v510, %v507
          %v640 = vpack.c.b16 %v514, %v511
          %v641 = vpack.c.b16 %v515, %v512
          %v642 = vpack.c.b16 %v516, %v513
          %v643 = vpack.c.b16 %v520, %v517
          %v644 = vpack.c.b16 %v521, %v518
          %v645 = vpack.c.b16 %v522, %v519
          %v646 = vpack.c.b16 %v526, %v523
          %v647 = vpack.c.b16 %v527, %v524
          %v648 = vpack.c.b16 %v528, %v525
          %v649 = vpack.c.b16 %v532, %v529
          %v650 = vpack.c.b16 %v533, %v530
          %v651 = vpack.c.b16 %v534, %v531
          %v652 = vpack.c.b16 %v538, %v535
          %v653 = vpack.c.b16 %v539, %v536
          %v654 = vpack.c.b16 %v540, %v537
          %v655 = vpack.c.b16 %v544, %v541
          %v656 = vpack.c.b16 %v545, %v542
          %v657 = vpack.c.b16 %v546, %v543
          %v658 = vpack.c.b16 %v550, %v547
          %v659 = vpack.c.b16 %v551, %v548
          %v660 = vpack.c.b16 %v552, %v549
          %v661 = vpack.c.b16 %v556, %v553
          %v662 = vpack.c.b16 %v557, %v554
          %v663 = vpack.c.b16 %v558, %v555
          %v664 = vpack.c.b16 %v562, %v559
          %v665 = vpack.c.b16 %v563, %v560
          %v666 = vpack.c.b16 %v564, %v561
          %v667 = vpack.c.b16 %v568, %v565
          %v668 = vpack.c.b16 %v569, %v566
          %v669 = vpack.c.b16 %v570, %v567
          %v670 = vpack.c.b16 %v574, %v571
          %v671 = vpack.c.b16 %v575, %v572
          %v672 = vpack.c.b16 %v576, %v573
          %v673 = vpack.c.b16 %v580, %v577
          %v674 = vpack.c.b16 %v581, %v578
          %v675 = vpack.c.b16 %v582, %v579
          %v676 = vpack.c.b16 %v586, %v583
          %v677 = vpack.c.b16 %v587, %v584
          %v678 = vpack.c.b16 %v588, %v585
          %v679 = vpack.c.b16 %v592, %v589
          %v680 = vpack.c.b16 %v593, %v590
          %v681 = vpack.c.b16 %v594, %v591
          %v682 = vpack.c.b16 %v598, %v595
          %v683 = vpack.c.b16 %v599, %v596
          %v684 = vpack.c.b16 %v600, %v597
          %v685 = vpack.c.b16 %v604, %v601
          %v686 = vpack.c.b16 %v605, %v602
          %v687 = vpack.c.b16 %v606, %v603
          %v688 = vpack.c.b16 %v610, %v607
          %v689 = vpack.c.b16 %v611, %v608
          %v690 = vpack.c.b16 %v612, %v609
          %v691 = vpack.c.b16 %v616, %v613
          %v692 = vpack.c.b16 %v617, %v614
          %v693 = vpack.c.b16 %v618, %v615
          %v694 = vpack.c.b16 %v622, %v619
          %v695 = vpack.c.b16 %v623, %v620
          %v696 = vpack.c.b16 %v624, %v621
          %769 = vmatprep.subr.bf16.mxu0 %v626
          %770 = vmatpush1.bf16.msra.mxu0 %v625
          %771 = vmatprep.subr.bf16.mxu0 %v629
          %772 = vmatpush1.bf16.msra.mxu0 %v628
          %773 = vmatprep.subr.bf16.mxu0 %v632
          %774 = vmatpush1.bf16.msra.mxu0 %v631
          %775 = vmatprep.subr.bf16.mxu0 %v635
          %776 = vmatpush1.bf16.msra.mxu0 %v634
          %777 = vmatprep.subr.bf16.mxu0 %v638
          %778 = vmatpush1.bf16.msra.mxu0 %v637
          %779 = vmatprep.subr.bf16.mxu0 %v641
          %780 = vmatpush1.bf16.msra.mxu0 %v640
          %781 = vmatprep.subr.bf16.mxu0 %v644
          %782 = vmatpush1.bf16.msra.mxu0 %v643
          %783 = vmatprep.subr.bf16.mxu0 %v647
          %784 = vmatpush1.bf16.msra.mxu0 %v646
          %785 = vmatprep.subr.bf16.mxu0 %v650
          %786 = vmatpush1.bf16.msra.mxu0 %v649
          %787 = vmatprep.subr.bf16.mxu0 %v653
          %788 = vmatpush1.bf16.msra.mxu0 %v652
          %789 = vmatprep.subr.bf16.mxu0 %v656
          %790 = vmatpush1.bf16.msra.mxu0 %v655
          %791 = vmatprep.subr.bf16.mxu0 %v659
          %792 = vmatpush1.bf16.msra.mxu0 %v658
          %793 = vmatprep.subr.bf16.mxu0 %v662
          %794 = vmatpush1.bf16.msra.mxu0 %v661
          %795 = vmatprep.subr.bf16.mxu0 %v665
          %796 = vmatpush1.bf16.msra.mxu0 %v664
          %797 = vmatprep.subr.bf16.mxu0 %v668
          %798 = vmatpush1.bf16.msra.mxu0 %v667
          %799 = vmatprep.subr.bf16.mxu0 %v671
          %800 = vmatpush1.bf16.msra.mxu0 %v670
          %801 = vmatprep.mubr.bf16.mxu0 %v381
          %802 = vmatmul.mubr.bf16.gmra.mrb[0].mxu0 %v373
          %v803 = vpop.f32.mrb[0].mxu0
          %v804 = vadd.f32 0.0, %v803
          %v805 = vpop.f32.mrb[0].mxu0
          %v806 = vadd.f32 0.0, %v805
          %v807 = vpop.f32.mrb[0].mxu0
          %v808 = vpop.f32.mrb[0].mxu0
          %809 = vdwg.mxu0
          %810 = vmatprep.subr.bf16.mxu0 %v674
          %811 = vmatpush1.bf16.msra.mxu0 %v673
          %812 = vmatprep.subr.bf16.mxu0 %v677
          %813 = vmatpush1.bf16.msra.mxu0 %v676
          %814 = vmatprep.subr.bf16.mxu0 %v680
          %815 = vmatpush1.bf16.msra.mxu0 %v679
          %816 = vmatprep.subr.bf16.mxu0 %v683
          %817 = vmatpush1.bf16.msra.mxu0 %v682
          %818 = vmatprep.subr.bf16.mxu0 %v686
          %819 = vmatpush1.bf16.msra.mxu0 %v685
          %820 = vmatprep.subr.bf16.mxu0 %v689
          %821 = vmatpush1.bf16.msra.mxu0 %v688
          %822 = vmatprep.subr.bf16.mxu0 %v692
          %823 = vmatpush1.bf16.msra.mxu0 %v691
          %824 = vmatprep.subr.bf16.mxu0 %v695
          %825 = vmatpush1.bf16.msra.mxu0 %v694
          %826 = vmatprep.subr.bf16.mxu0 0
          %827 = vmatpush1.bf16.msra.mxu0 0
          %828 = vmatprep.subr.bf16.mxu0 0
          %829 = vmatpush1.bf16.msra.mxu0 0
          %830 = vmatprep.subr.bf16.mxu0 0
          %831 = vmatpush1.bf16.msra.mxu0 0
          %832 = vmatprep.subr.bf16.mxu0 0
          %833 = vmatpush1.bf16.msra.mxu0 0
          %834 = vmatprep.subr.bf16.mxu0 0
          %835 = vmatpush1.bf16.msra.mxu0 0
          %836 = vmatprep.subr.bf16.mxu0 0
          %837 = vmatpush1.bf16.msra.mxu0 0
          %838 = vmatprep.subr.bf16.mxu0 0
          %839 = vmatpush1.bf16.msra.mxu0 0
          %840 = vmatprep.subr.bf16.mxu0 0
          %841 = vmatpush1.bf16.msra.mxu0 0
          %842 = vmatprep.mubr.bf16.mxu0 0
          %843 = vmatmul.mubr.bf16.gmra.mrb[0].mxu0 %v380
          %v844 = vpop.f32.mrb[0].mxu0
          %v845 = vadd.f32 %v804, %v844
          %v846 = vpop.f32.mrb[0].mxu0
          %v847 = vadd.f32 %v806, %v846
          %v848 = vpop.f32.mrb[0].mxu0
          %v849 = vpop.f32.mrb[0].mxu0
          %850 = vdwg.mxu0
          %851 = vmatprep.subr.bf16.mxu0 0
          %852 = vmatpush1.bf16.msra.mxu0 %v627
          %853 = vmatprep.subr.bf16.mxu0 0
          %854 = vmatpush1.bf16.msra.mxu0 %v630
          %855 = vmatprep.subr.bf16.mxu0 0
          %856 = vmatpush1.bf16.msra.mxu0 %v633
          %857 = vmatprep.subr.bf16.mxu0 0
          %858 = vmatpush1.bf16.msra.mxu0 %v636
          %859 = vmatprep.subr.bf16.mxu0 0
          %860 = vmatpush1.bf16.msra.mxu0 %v639
          %861 = vmatprep.subr.bf16.mxu0 0
          %862 = vmatpush1.bf16.msra.mxu0 %v642
          %863 = vmatprep.subr.bf16.mxu0 0
          %864 = vmatpush1.bf16.msra.mxu0 %v645
          %865 = vmatprep.subr.bf16.mxu0 0
          %866 = vmatpush1.bf16.msra.mxu0 %v648
          %867 = vmatprep.subr.bf16.mxu0 0
          %868 = vmatpush1.bf16.msra.mxu0 %v651
          %869 = vmatprep.subr.bf16.mxu0 0
          %870 = vmatpush1.bf16.msra.mxu0 %v654
          %871 = vmatprep.subr.bf16.mxu0 0
          %872 = vmatpush1.bf16.msra.mxu0 %v657
          %873 = vmatprep.subr.bf16.mxu0 0
          %874 = vmatpush1.bf16.msra.mxu0 %v660
          %875 = vmatprep.subr.bf16.mxu0 0
          %876 = vmatpush1.bf16.msra.mxu0 %v663
          %877 = vmatprep.subr.bf16.mxu0 0
          %878 = vmatpush1.bf16.msra.mxu0 %v666
          %879 = vmatprep.subr.bf16.mxu0 0
          %880 = vmatpush1.bf16.msra.mxu0 %v669
          %881 = vmatprep.subr.bf16.mxu0 0
          %882 = vmatpush1.bf16.msra.mxu0 %v672
          %883 = vmatprep.mubr.bf16.mxu0 %v381
          %884 = vmatmul.mubr.bf16.gmra.mrb[0].mxu0 %v373
          %v885 = vpop.f32.mrb[0].mxu0
          %v886 = vadd.f32 0.0, %v885
          %v887 = vpop.f32.mrb[0].mxu0
          %v888 = vpop.f32.mrb[0].mxu0
          %v889 = vpop.f32.mrb[0].mxu0
          %890 = vdwg.mxu0
          %891 = vmatprep.subr.bf16.mxu0 0
          %892 = vmatpush1.bf16.msra.mxu0 %v675
          %893 = vmatprep.subr.bf16.mxu0 0
          %894 = vmatpush1.bf16.msra.mxu0 %v678
          %895 = vmatprep.subr.bf16.mxu0 0
          %896 = vmatpush1.bf16.msra.mxu0 %v681
          %897 = vmatprep.subr.bf16.mxu0 0
          %898 = vmatpush1.bf16.msra.mxu0 %v684
          %899 = vmatprep.subr.bf16.mxu0 0
          %900 = vmatpush1.bf16.msra.mxu0 %v687
          %901 = vmatprep.subr.bf16.mxu0 0
          %902 = vmatpush1.bf16.msra.mxu0 %v690
          %903 = vmatprep.subr.bf16.mxu0 0
          %904 = vmatpush1.bf16.msra.mxu0 %v693
          %905 = vmatprep.subr.bf16.mxu0 0
          %906 = vmatpush1.bf16.msra.mxu0 %v696
          %907 = vmatprep.subr.bf16.mxu0 0
          %908 = vmatpush1.bf16.msra.mxu0 0
          %909 = vmatprep.subr.bf16.mxu0 0
          %910 = vmatpush1.bf16.msra.mxu0 0
          %911 = vmatprep.subr.bf16.mxu0 0
          %912 = vmatpush1.bf16.msra.mxu0 0
          %913 = vmatprep.subr.bf16.mxu0 0
          %914 = vmatpush1.bf16.msra.mxu0 0
          %915 = vmatprep.subr.bf16.mxu0 0
          %916 = vmatpush1.bf16.msra.mxu0 0
          %917 = vmatprep.subr.bf16.mxu0 0
          %918 = vmatpush1.bf16.msra.mxu0 0
          %919 = vmatprep.subr.bf16.mxu0 0
          %920 = vmatpush1.bf16.msra.mxu0 0
          %921 = vmatprep.subr.bf16.mxu0 0
          %922 = vmatpush1.bf16.msra.mxu0 0
          %923 = vmatprep.mubr.bf16.mxu0 0
          %924 = vmatmul.mubr.bf16.gmra.mrb[0].mxu0 %v380
          %v925 = vpop.f32.mrb[0].mxu0
          %v926 = vadd.f32 %v886, %v925
          %v927 = vpop.f32.mrb[0].mxu0
          %v928 = vpop.f32.mrb[0].mxu0
          %v929 = vpop.f32.mrb[0].mxu0
          %930 = vdwg.mxu0
          %v931 = vld [vmem:[%s2] sm:$0xf]
          %v932 = vpack.c.bf16 %v845, %v845
          %v933 = vpack.c.bf16 %v847, %v847
          %v934 = vpack.c.bf16 %v926, %v926
          %vm935 = vcmask 31744
          %v937 = vsel %vm935, %v931, 0
          %vm939 = vcmask 1041408
          %v941 = vsel %vm939, %v932, 0
          %v944 = vsel %vm939, %v933, 0
          %v947 = vsel %vm939, %v934, 0
          %949 = vmatprep.subr.bf16.mxu0 %v944
          %950 = vmatpush1.bf16.msra.mxu0 %v941
          %951 = vmatprep.subr.bf16.mxu0 0
          %952 = vmatpush1.bf16.msra.mxu0 0
          %953 = vmatprep.subr.bf16.mxu0 0
          %954 = vmatpush1.bf16.msra.mxu0 0
          %955 = vmatprep.subr.bf16.mxu0 0
          %956 = vmatpush1.bf16.msra.mxu0 0
          %957 = vmatprep.subr.bf16.mxu0 0
          %958 = vmatpush1.bf16.msra.mxu0 0
          %959 = vmatprep.subr.bf16.mxu0 0
          %960 = vmatpush1.bf16.msra.mxu0 0
          %961 = vmatprep.subr.bf16.mxu0 0
          %962 = vmatpush1.bf16.msra.mxu0 0
          %963 = vmatprep.subr.bf16.mxu0 0
          %964 = vmatpush1.bf16.msra.mxu0 0
          %965 = vmatprep.subr.bf16.mxu0 0
          %966 = vmatpush1.bf16.msra.mxu0 0
          %967 = vmatprep.subr.bf16.mxu0 0
          %968 = vmatpush1.bf16.msra.mxu0 0
          %969 = vmatprep.subr.bf16.mxu0 0
          %970 = vmatpush1.bf16.msra.mxu0 0
          %971 = vmatprep.subr.bf16.mxu0 0
          %972 = vmatpush1.bf16.msra.mxu0 0
          %973 = vmatprep.subr.bf16.mxu0 0
          %974 = vmatpush1.bf16.msra.mxu0 0
          %975 = vmatprep.subr.bf16.mxu0 0
          %976 = vmatpush1.bf16.msra.mxu0 0
          %977 = vmatprep.subr.bf16.mxu0 0
          %978 = vmatpush1.bf16.msra.mxu0 0
          %979 = vmatprep.subr.bf16.mxu0 0
          %980 = vmatpush1.bf16.msra.mxu0 0
          %981 = vmatprep.mubr.bf16.mxu0 0
          %982 = vmatmul.mubr.bf16.gmra.mrb[0].mxu0 %v937
          %v983 = vpop.f32.mrb[0].mxu0
          %v984 = vadd.f32 0.0, %v983
          %v985 = vpop.f32.mrb[0].mxu0
          %v986 = vadd.f32 0.0, %v985
          %v987 = vpop.f32.mrb[0].mxu0
          %v988 = vpop.f32.mrb[0].mxu0
          %989 = vdwg.mxu0
          %990 = vmatprep.subr.bf16.mxu0 0
          %991 = vmatpush1.bf16.msra.mxu0 %v947
          %992 = vmatprep.subr.bf16.mxu0 0
          %993 = vmatpush1.bf16.msra.mxu0 0
          %994 = vmatprep.subr.bf16.mxu0 0
          %995 = vmatpush1.bf16.msra.mxu0 0
          %996 = vmatprep.subr.bf16.mxu0 0
          %997 = vmatpush1.bf16.msra.mxu0 0
          %998 = vmatprep.subr.bf16.mxu0 0
          %999 = vmatpush1.bf16.msra.mxu0 0
          %1000 = vmatprep.subr.bf16.mxu0 0
          %1001 = vmatpush1.bf16.msra.mxu0 0
          %1002 = vmatprep.subr.bf16.mxu0 0
          %1003 = vmatpush1.bf16.msra.mxu0 0
          %1004 = vmatprep.subr.bf16.mxu0 0
          %1005 = vmatpush1.bf16.msra.mxu0 0
          %1006 = vmatprep.subr.bf16.mxu0 0
          %1007 = vmatpush1.bf16.msra.mxu0 0
          %1008 = vmatprep.subr.bf16.mxu0 0
          %1009 = vmatpush1.bf16.msra.mxu0 0
          %1010 = vmatprep.subr.bf16.mxu0 0
          %1011 = vmatpush1.bf16.msra.mxu0 0
          %1012 = vmatprep.subr.bf16.mxu0 0
          %1013 = vmatpush1.bf16.msra.mxu0 0
          %1014 = vmatprep.subr.bf16.mxu0 0
          %1015 = vmatpush1.bf16.msra.mxu0 0
          %1016 = vmatprep.subr.bf16.mxu0 0
          %1017 = vmatpush1.bf16.msra.mxu0 0
          %1018 = vmatprep.subr.bf16.mxu0 0
          %1019 = vmatpush1.bf16.msra.mxu0 0
          %1020 = vmatprep.subr.bf16.mxu0 0
          %1021 = vmatpush1.bf16.msra.mxu0 0
          %1022 = vmatprep.mubr.bf16.mxu0 0
          %1023 = vmatmul.mubr.bf16.gmra.mrb[0].mxu0 %v937
          %v1024 = vpop.f32.mrb[0].mxu0
          %v1025 = vadd.f32 0.0, %v1024
          %v1026 = vpop.f32.mrb[0].mxu0
          %v1027 = vpop.f32.mrb[0].mxu0
          %v1028 = vpop.f32.mrb[0].mxu0
          %1029 = vdwg.mxu0
          %v1030 = vld [vmem:[#allocation2] sm:$0xff]
          %v1031 = vadd.f32 %v984, %v986
          %v1032 = vadd.f32 %v1031, %v1025
          %1033 = vadd.xlane.f32.xlu0 %v1032
          %v1034 = vpop.xlane.xlu0 %1033
          %v1035 = vadd.f32 %v1030, %v1034
          %vm1036 = vcmask 7168
          %1037 = vst.msk [vmem:[#allocation2] sm:$0xff] %vm1036, %v1035
          %v1038 = vld [vmem:[#allocation3] sm:$0xff]
          %v1039 = vmul.f32 %v984, %v984
          %v1040 = vmul.f32 %v986, %v986
          %v1041 = vmul.f32 %v1025, %v1025
          %v1042 = vadd.f32 %v1039, %v1040
          %v1043 = vadd.f32 %v1042, %v1041
          %1044 = vadd.xlane.f32.xlu0 %v1043
          %v1045 = vpop.xlane.xlu0 %1044
          %v1046 = vadd.f32 %v1038, %v1045
          %1047 = vst.msk [vmem:[#allocation3] sm:$0xff] %vm1036, %v1046
        $region48: #{tpu_custom_call.1} parent=39 // pred_fallthru
          _
        %p1048 = scmp.eq.s32.totalorder %s24, 1
        // Predicated region
        $region53: #{tpu_custom_call.1} parent=39 // pred_check
          %p1049 = pneg %p1048
        $region54: #{tpu_custom_call.1} parent=39 // pred_check_branch
          %1051 = sbr.rel (%p1049) target = $region56
        $region55: #{tpu_custom_call.1} parent=39 // pred_region
          %v1052 = vld [vmem:[%s252] sm:$0x3f]
          %v1053 = vld [vmem:[#allocation4] sm:$0xff]
          %v1054 = vld [vmem:[#allocation4 + $0x8] sm:$0xf]
          %v1055 = vld [vmem:[#allocation4 + $0xc] sm:$0xff]
          %v1056 = vld [vmem:[#allocation4 + $0x14] sm:$0xf]
          %v1057 = vld [vmem:[#allocation4 + $0x18] sm:$0xff]
          %v1058 = vld [vmem:[#allocation4 + $0x20] sm:$0xf]
          %v1059 = vld [vmem:[#allocation4 + $0x24] sm:$0xff]
          %v1060 = vld [vmem:[#allocation4 + $0x2c] sm:$0xf]
          %v1061 = vld [vmem:[#allocation4 + $0x30] sm:$0xff]
          %v1062 = vld [vmem:[#allocation4 + $0x38] sm:$0xf]
          %v1063 = vld [vmem:[#allocation4 + $0x3c] sm:$0xff]
          %v1064 = vld [vmem:[#allocation4 + $0x44] sm:$0xf]
          %v1065 = vld [vmem:[#allocation4 + $0x48] sm:$0xff]
          %v1066 = vld [vmem:[#allocation4 + $0x50] sm:$0xf]
          %v1067 = vld [vmem:[#allocation4 + $0x54] sm:$0xff]
          %v1068 = vld [vmem:[#allocation4 + $0x5c] sm:$0xf]
          %v1069 = vld [vmem:[#allocation4 + $0x60] sm:$0xff]
          %v1070 = vld [vmem:[#allocation4 + $0x68] sm:$0xf]
          %v1071 = vld [vmem:[#allocation4 + $0x6c] sm:$0xff]
          %v1072 = vld [vmem:[#allocation4 + $0x74] sm:$0xf]
          %v1073 = vld [vmem:[#allocation4 + $0x78] sm:$0xff]
          %v1074 = vld [vmem:[#allocation4 + $0x80] sm:$0xf]
          %v1075 = vld [vmem:[#allocation4 + $0x84] sm:$0xff]
          %v1076 = vld [vmem:[#allocation4 + $0x8c] sm:$0xf]
          %v1077 = vld [vmem:[#allocation4 + $0x90] sm:$0xff]
          %v1078 = vld [vmem:[#allocation4 + $0x98] sm:$0xf]
          %v1079 = vld [vmem:[#allocation4 + $0x9c] sm:$0xff]
          %v1080 = vld [vmem:[#allocation4 + $0xa4] sm:$0xf]
          %v1081 = vld [vmem:[#allocation4 + $0xa8] sm:$0xff]
          %v1082 = vld [vmem:[#allocation4 + $0xb0] sm:$0xf]
          %v1083 = vld [vmem:[#allocation4 + $0xb4] sm:$0xff]
          %v1084 = vld [vmem:[#allocation4 + $0xbc] sm:$0xf]
          %v1085 = vld [vmem:[#allocation4 + $0xc0] sm:$0xff]
          %v1086 = vld [vmem:[#allocation4 + $0xc8] sm:$0xf]
          %v1087 = vld [vmem:[#allocation4 + $0xcc] sm:$0xff]
          %v1088 = vld [vmem:[#allocation4 + $0xd4] sm:$0xf]
          %v1089 = vld [vmem:[#allocation4 + $0xd8] sm:$0xff]
          %v1090 = vld [vmem:[#allocation4 + $0xe0] sm:$0xf]
          %v1091 = vld [vmem:[#allocation4 + $0xe4] sm:$0xff]
          %v1092 = vld [vmem:[#allocation4 + $0xec] sm:$0xf]
          %v1093 = vld [vmem:[#allocation4 + $0xf0] sm:$0xff]
          %v1094 = vld [vmem:[#allocation4 + $0xf8] sm:$0xf]
          %v1095 = vld [vmem:[#allocation4 + $0xfc] sm:$0xff]
          %v1096 = vld [vmem:[#allocation4 + $0x104] sm:$0xf]
          %v1097 = vld [vmem:[#allocation4 + $0x108] sm:$0xff]
          %v1098 = vld [vmem:[#allocation4 + $0x110] sm:$0xf]
          %v1099 = vld [vmem:[#allocation4 + $0x114] sm:$0xff]
          %v1100 = vld [vmem:[#allocation4 + $0x11c] sm:$0xf]
          %v1101 = vld [vmem:[#allocation4 + $0x120] sm:$0xff]
          %v1102 = vld [vmem:[#allocation4 + $0x128] sm:$0xf]
          %v1103 = vld [vmem:[#allocation4 + $0x12c] sm:$0xff]
          %v1104 = vld [vmem:[#allocation4 + $0x134] sm:$0xf]
          %v1105 = vld [vmem:[#allocation4 + $0x138] sm:$0xff]
          %v1106 = vld [vmem:[#allocation4 + $0x140] sm:$0xf]
          %v1107 = vld [vmem:[#allocation4 + $0x144] sm:$0xff]
          %v1108 = vld [vmem:[#allocation4 + $0x14c] sm:$0xf]
          %v1109 = vld [vmem:[#allocation4 + $0x150] sm:$0xff]
          %v1110 = vld [vmem:[#allocation4 + $0x158] sm:$0xf]
          %v1111 = vld [vmem:[#allocation4 + $0x15c] sm:$0xff]
          %v1112 = vld [vmem:[#allocation4 + $0x164] sm:$0xf]
          %v1113 = vld [vmem:[#allocation4 + $0x168] sm:$0xff]
          %v1114 = vld [vmem:[#allocation4 + $0x170] sm:$0xf]
          %v1115 = vld [vmem:[#allocation4 + $0x174] sm:$0xff]
          %v1116 = vld [vmem:[#allocation4 + $0x17c] sm:$0xf]
          %v1117 = vld [vmem:[#allocation4 + $0x180] sm:$0xff]
          %v1118 = vld [vmem:[#allocation4 + $0x188] sm:$0xf]
          %v1119 = vld [vmem:[#allocation4 + $0x18c] sm:$0xff]
          %v1120 = vld [vmem:[#allocation4 + $0x194] sm:$0xf]
          %v1121 = vld [vmem:[#allocation4 + $0x198] sm:$0xff]
          %v1122 = vld [vmem:[#allocation4 + $0x1a0] sm:$0xf]
          %v1123 = vld [vmem:[#allocation4 + $0x1a4] sm:$0xff]
          %v1124 = vld [vmem:[#allocation4 + $0x1ac] sm:$0xf]
          %v1125 = vld [vmem:[#allocation4 + $0x1b0] sm:$0xff]
          %v1126 = vld [vmem:[#allocation4 + $0x1b8] sm:$0xf]
          %v1127 = vld [vmem:[#allocation4 + $0x1bc] sm:$0xff]
          %v1128 = vld [vmem:[#allocation4 + $0x1c4] sm:$0xf]
          %v1129 = vld [vmem:[#allocation4 + $0x1c8] sm:$0xff]
          %v1130 = vld [vmem:[#allocation4 + $0x1d0] sm:$0xf]
          %v1131 = vld [vmem:[#allocation4 + $0x1d4] sm:$0xff]
          %v1132 = vld [vmem:[#allocation4 + $0x1dc] sm:$0xf]
          %v1133 = vld [vmem:[#allocation4 + $0x1e0] sm:$0xff]
          %v1134 = vld [vmem:[#allocation4 + $0x1e8] sm:$0xf]
          %v1135 = vld [vmem:[#allocation4 + $0x1ec] sm:$0xff]
          %v1136 = vld [vmem:[#allocation4 + $0x1f4] sm:$0xf]
          %v1137 = vld [vmem:[#allocation4 + $0x1f8] sm:$0xff]
          %v1138 = vld [vmem:[#allocation4 + $0x200] sm:$0xf]
          %v1139 = vld [vmem:[#allocation4 + $0x204] sm:$0xff]
          %v1140 = vld [vmem:[#allocation4 + $0x20c] sm:$0xf]
          %v1141 = vld [vmem:[#allocation4 + $0x210] sm:$0xff]
          %v1142 = vld [vmem:[#allocation4 + $0x218] sm:$0xf]
          %v1143 = vld [vmem:[#allocation4 + $0x21c] sm:$0xff]
          %v1144 = vld [vmem:[#allocation4 + $0x224] sm:$0xf]
          %v1145 = vld [vmem:[#allocation4 + $0x228] sm:$0xff]
          %v1146 = vld [vmem:[#allocation4 + $0x230] sm:$0xf]
          %v1147 = vld [vmem:[#allocation4 + $0x234] sm:$0xff]
          %v1148 = vld [vmem:[#allocation4 + $0x23c] sm:$0xf]
          %v1150 = vcombine.high %v1052, %v1052
          %v1152 = vunpack.c.l.s4 1983009808
          %v1153 = vunpack.c.0.s8 %v1152
          %v1154 = vlaneseq
          %v1155 = vshrl.u32 %v1154, 7
          %v1156 = vsub.s32 %v1153, %v1155
          %v1157 = vrot.slane %v1052, %v1156
          %v1159 = vunpack.c.l.s4 1983009808
          %v1160 = vunpack.c.0.s8 %v1159
          %v1161 = vlaneseq
          %v1162 = vshrl.u32 %v1161, 7
          %v1163 = vsub.s32 %v1160, %v1162
          %v1164 = vrot.slane %v1150, %v1163
          %v1165 = vcombine.high %v1157, %v1157
          %v1265 = vunpack.c.l.b16 %v1053
          %v1266 = vunpack.c.h.b16 %v1053
          %v1267 = vunpack.c.l.b16 %v1054
          %v1268 = vunpack.c.l.b16 %v1055
          %v1269 = vunpack.c.h.b16 %v1055
          %v1270 = vunpack.c.l.b16 %v1056
          %v1271 = vunpack.c.l.b16 %v1057
          %v1272 = vunpack.c.h.b16 %v1057
          %v1273 = vunpack.c.l.b16 %v1058
          %v1274 = vunpack.c.l.b16 %v1059
          %v1275 = vunpack.c.h.b16 %v1059
          %v1276 = vunpack.c.l.b16 %v1060
          %v1277 = vunpack.c.l.b16 %v1061
          %v1278 = vunpack.c.h.b16 %v1061
          %v1279 = vunpack.c.l.b16 %v1062
          %v1280 = vunpack.c.l.b16 %v1063
          %v1281 = vunpack.c.h.b16 %v1063
          %v1282 = vunpack.c.l.b16 %v1064
          %v1283 = vunpack.c.l.b16 %v1065
          %v1284 = vunpack.c.h.b16 %v1065
          %v1285 = vunpack.c.l.b16 %v1066
          %v1286 = vunpack.c.l.b16 %v1067
          %v1287 = vunpack.c.h.b16 %v1067
          %v1288 = vunpack.c.l.b16 %v1068
          %v1289 = vunpack.c.l.b16 %v1069
          %v1290 = vunpack.c.h.b16 %v1069
          %v1291 = vunpack.c.l.b16 %v1070
          %v1292 = vunpack.c.l.b16 %v1071
          %v1293 = vunpack.c.h.b16 %v1071
          %v1294 = vunpack.c.l.b16 %v1072
          %v1295 = vunpack.c.l.b16 %v1073
          %v1296 = vunpack.c.h.b16 %v1073
          %v1297 = vunpack.c.l.b16 %v1074
          %v1298 = vunpack.c.l.b16 %v1075
          %v1299 = vunpack.c.h.b16 %v1075
          %v1300 = vunpack.c.l.b16 %v1076
          %v1301 = vunpack.c.l.b16 %v1077
          %v1302 = vunpack.c.h.b16 %v1077
          %v1303 = vunpack.c.l.b16 %v1078
          %v1304 = vunpack.c.l.b16 %v1079
          %v1305 = vunpack.c.h.b16 %v1079
          %v1306 = vunpack.c.l.b16 %v1080
          %v1307 = vunpack.c.l.b16 %v1081
          %v1308 = vunpack.c.h.b16 %v1081
          %v1309 = vunpack.c.l.b16 %v1082
          %v1310 = vunpack.c.l.b16 %v1083
          %v1311 = vunpack.c.h.b16 %v1083
          %v1312 = vunpack.c.l.b16 %v1084
          %v1313 = vunpack.c.l.b16 %v1085
          %v1314 = vunpack.c.h.b16 %v1085
          %v1315 = vunpack.c.l.b16 %v1086
          %v1316 = vunpack.c.l.b16 %v1087
          %v1317 = vunpack.c.h.b16 %v1087
          %v1318 = vunpack.c.l.b16 %v1088
          %v1319 = vunpack.c.l.b16 %v1089
          %v1320 = vunpack.c.h.b16 %v1089
          %v1321 = vunpack.c.l.b16 %v1090
          %v1322 = vunpack.c.l.b16 %v1091
          %v1323 = vunpack.c.h.b16 %v1091
          %v1324 = vunpack.c.l.b16 %v1092
          %v1325 = vunpack.c.l.b16 %v1093
          %v1326 = vunpack.c.h.b16 %v1093
          %v1327 = vunpack.c.l.b16 %v1094
          %v1328 = vunpack.c.l.b16 %v1095
          %v1329 = vunpack.c.h.b16 %v1095
          %v1330 = vunpack.c.l.b16 %v1096
          %v1331 = vunpack.c.l.b16 %v1097
          %v1332 = vunpack.c.h.b16 %v1097
          %v1333 = vunpack.c.l.b16 %v1098
          %v1334 = vunpack.c.l.b16 %v1099
          %v1335 = vunpack.c.h.b16 %v1099
          %v1336 = vunpack.c.l.b16 %v1100
          %v1337 = vunpack.c.l.b16 %v1101
          %v1338 = vunpack.c.h.b16 %v1101
          %v1339 = vunpack.c.l.b16 %v1102
          %v1340 = vunpack.c.l.b16 %v1103
          %v1341 = vunpack.c.h.b16 %v1103
          %v1342 = vunpack.c.l.b16 %v1104
          %v1343 = vunpack.c.l.b16 %v1105
          %v1344 = vunpack.c.h.b16 %v1105
          %v1345 = vunpack.c.l.b16 %v1106
          %v1346 = vunpack.c.l.b16 %v1107
          %v1347 = vunpack.c.h.b16 %v1107
          %v1348 = vunpack.c.l.b16 %v1108
          %v1349 = vunpack.c.l.b16 %v1109
          %v1350 = vunpack.c.h.b16 %v1109
          %v1351 = vunpack.c.l.b16 %v1110
          %v1352 = vunpack.c.l.b16 %v1111
          %v1353 = vunpack.c.h.b16 %v1111
          %v1354 = vunpack.c.l.b16 %v1112
          %v1355 = vunpack.c.l.b16 %v1113
          %v1356 = vunpack.c.h.b16 %v1113
          %v1357 = vunpack.c.l.b16 %v1114
          %v1358 = vunpack.c.l.b16 %v1115
          %v1359 = vunpack.c.h.b16 %v1115
          %v1360 = vunpack.c.l.b16 %v1116
          %v1361 = vunpack.c.l.b16 %v1117
          %v1362 = vunpack.c.h.b16 %v1117
          %v1363 = vunpack.c.l.b16 %v1118
          %v1364 = vunpack.c.l.b16 %v1119
          %v1365 = vunpack.c.h.b16 %v1119
          %v1366 = vunpack.c.l.b16 %v1120
          %v1367 = vunpack.c.l.b16 %v1121
          %v1368 = vunpack.c.h.b16 %v1121
          %v1369 = vunpack.c.l.b16 %v1122
          %v1370 = vunpack.c.l.b16 %v1123
          %v1371 = vunpack.c.h.b16 %v1123
          %v1372 = vunpack.c.l.b16 %v1124
          %v1373 = vunpack.c.l.b16 %v1125
          %v1374 = vunpack.c.h.b16 %v1125
          %v1375 = vunpack.c.l.b16 %v1126
          %v1376 = vunpack.c.l.b16 %v1127
          %v1377 = vunpack.c.h.b16 %v1127
          %v1378 = vunpack.c.l.b16 %v1128
          %v1379 = vunpack.c.l.b16 %v1129
          %v1380 = vunpack.c.h.b16 %v1129
          %v1381 = vunpack.c.l.b16 %v1130
          %v1382 = vunpack.c.l.b16 %v1131
          %v1383 = vunpack.c.h.b16 %v1131
          %v1384 = vunpack.c.l.b16 %v1132
          %v1385 = vunpack.c.l.b16 %v1133
          %v1386 = vunpack.c.h.b16 %v1133
          %v1387 = vunpack.c.l.b16 %v1134
          %v1388 = vunpack.c.l.b16 %v1135
          %v1389 = vunpack.c.h.b16 %v1135
          %v1390 = vunpack.c.l.b16 %v1136
          %v1391 = vunpack.c.l.b16 %v1137
          %v1392 = vunpack.c.h.b16 %v1137
          %v1393 = vunpack.c.l.b16 %v1138
          %v1394 = vunpack.c.l.b16 %v1139
          %v1395 = vunpack.c.h.b16 %v1139
          %v1396 = vunpack.c.l.b16 %v1140
          %v1397 = vunpack.c.l.b16 %v1141
          %v1398 = vunpack.c.h.b16 %v1141
          %v1399 = vunpack.c.l.b16 %v1142
          %v1400 = vunpack.c.l.b16 %v1143
          %v1401 = vunpack.c.h.b16 %v1143
          %v1402 = vunpack.c.l.b16 %v1144
          %v1403 = vunpack.c.l.b16 %v1145
          %v1404 = vunpack.c.h.b16 %v1145
          %v1405 = vunpack.c.l.b16 %v1146
          %v1406 = vunpack.c.l.b16 %v1147
          %v1407 = vunpack.c.h.b16 %v1147
          %v1408 = vunpack.c.l.b16 %v1148
          %v1409 = vpack.c.b16 %v1268, %v1265
          %v1410 = vpack.c.b16 %v1269, %v1266
          %v1411 = vpack.c.b16 %v1270, %v1267
          %v1412 = vpack.c.b16 %v1274, %v1271
          %v1413 = vpack.c.b16 %v1275, %v1272
          %v1414 = vpack.c.b16 %v1276, %v1273
          %v1415 = vpack.c.b16 %v1280, %v1277
          %v1416 = vpack.c.b16 %v1281, %v1278
          %v1417 = vpack.c.b16 %v1282, %v1279
          %v1418 = vpack.c.b16 %v1286, %v1283
          %v1419 = vpack.c.b16 %v1287, %v1284
          %v1420 = vpack.c.b16 %v1288, %v1285
          %v1421 = vpack.c.b16 %v1292, %v1289
          %v1422 = vpack.c.b16 %v1293, %v1290
          %v1423 = vpack.c.b16 %v1294, %v1291
          %v1424 = vpack.c.b16 %v1298, %v1295
          %v1425 = vpack.c.b16 %v1299, %v1296
          %v1426 = vpack.c.b16 %v1300, %v1297
          %v1427 = vpack.c.b16 %v1304, %v1301
          %v1428 = vpack.c.b16 %v1305, %v1302
          %v1429 = vpack.c.b16 %v1306, %v1303
          %v1430 = vpack.c.b16 %v1310, %v1307
          %v1431 = vpack.c.b16 %v1311, %v1308
          %v1432 = vpack.c.b16 %v1312, %v1309
          %v1433 = vpack.c.b16 %v1316, %v1313
          %v1434 = vpack.c.b16 %v1317, %v1314
          %v1435 = vpack.c.b16 %v1318, %v1315
          %v1436 = vpack.c.b16 %v1322, %v1319
          %v1437 = vpack.c.b16 %v1323, %v1320
          %v1438 = vpack.c.b16 %v1324, %v1321
          %v1439 = vpack.c.b16 %v1328, %v1325
          %v1440 = vpack.c.b16 %v1329, %v1326
          %v1441 = vpack.c.b16 %v1330, %v1327
          %v1442 = vpack.c.b16 %v1334, %v1331
          %v1443 = vpack.c.b16 %v1335, %v1332
          %v1444 = vpack.c.b16 %v1336, %v1333
          %v1445 = vpack.c.b16 %v1340, %v1337
          %v1446 = vpack.c.b16 %v1341, %v1338
          %v1447 = vpack.c.b16 %v1342, %v1339
          %v1448 = vpack.c.b16 %v1346, %v1343
          %v1449 = vpack.c.b16 %v1347, %v1344
          %v1450 = vpack.c.b16 %v1348, %v1345
          %v1451 = vpack.c.b16 %v1352, %v1349
          %v1452 = vpack.c.b16 %v1353, %v1350
          %v1453 = vpack.c.b16 %v1354, %v1351
          %v1454 = vpack.c.b16 %v1358, %v1355
          %v1455 = vpack.c.b16 %v1359, %v1356
          %v1456 = vpack.c.b16 %v1360, %v1357
          %v1457 = vpack.c.b16 %v1364, %v1361
          %v1458 = vpack.c.b16 %v1365, %v1362
          %v1459 = vpack.c.b16 %v1366, %v1363
          %v1460 = vpack.c.b16 %v1370, %v1367
          %v1461 = vpack.c.b16 %v1371, %v1368
          %v1462 = vpack.c.b16 %v1372, %v1369
          %v1463 = vpack.c.b16 %v1376, %v1373
          %v1464 = vpack.c.b16 %v1377, %v1374
          %v1465 = vpack.c.b16 %v1378, %v1375
          %v1466 = vpack.c.b16 %v1382, %v1379
          %v1467 = vpack.c.b16 %v1383, %v1380
          %v1468 = vpack.c.b16 %v1384, %v1381
          %v1469 = vpack.c.b16 %v1388, %v1385
          %v1470 = vpack.c.b16 %v1389, %v1386
          %v1471 = vpack.c.b16 %v1390, %v1387
          %v1472 = vpack.c.b16 %v1394, %v1391
          %v1473 = vpack.c.b16 %v1395, %v1392
          %v1474 = vpack.c.b16 %v1396, %v1393
          %v1475 = vpack.c.b16 %v1400, %v1397
          %v1476 = vpack.c.b16 %v1401, %v1398
          %v1477 = vpack.c.b16 %v1402, %v1399
          %v1478 = vpack.c.b16 %v1406, %v1403
          %v1479 = vpack.c.b16 %v1407, %v1404
          %v1480 = vpack.c.b16 %v1408, %v1405
          %1553 = vmatprep.subr.bf16.mxu0 %v1410
          %1554 = vmatpush1.bf16.msra.mxu0 %v1409
          %1555 = vmatprep.subr.bf16.mxu0 %v1413
          %1556 = vmatpush1.bf16.msra.mxu0 %v1412
          %1557 = vmatprep.subr.bf16.mxu0 %v1416
          %1558 = vmatpush1.bf16.msra.mxu0 %v1415
          %1559 = vmatprep.subr.bf16.mxu0 %v1419
          %1560 = vmatpush1.bf16.msra.mxu0 %v1418
          %1561 = vmatprep.subr.bf16.mxu0 %v1422
          %1562 = vmatpush1.bf16.msra.mxu0 %v1421
          %1563 = vmatprep.subr.bf16.mxu0 %v1425
          %1564 = vmatpush1.bf16.msra.mxu0 %v1424
          %1565 = vmatprep.subr.bf16.mxu0 %v1428
          %1566 = vmatpush1.bf16.msra.mxu0 %v1427
          %1567 = vmatprep.subr.bf16.mxu0 %v1431
          %1568 = vmatpush1.bf16.msra.mxu0 %v1430
          %1569 = vmatprep.subr.bf16.mxu0 %v1434
          %1570 = vmatpush1.bf16.msra.mxu0 %v1433
          %1571 = vmatprep.subr.bf16.mxu0 %v1437
          %1572 = vmatpush1.bf16.msra.mxu0 %v1436
          %1573 = vmatprep.subr.bf16.mxu0 %v1440
          %1574 = vmatpush1.bf16.msra.mxu0 %v1439
          %1575 = vmatprep.subr.bf16.mxu0 %v1443
          %1576 = vmatpush1.bf16.msra.mxu0 %v1442
          %1577 = vmatprep.subr.bf16.mxu0 %v1446
          %1578 = vmatpush1.bf16.msra.mxu0 %v1445
          %1579 = vmatprep.subr.bf16.mxu0 %v1449
          %1580 = vmatpush1.bf16.msra.mxu0 %v1448
          %1581 = vmatprep.subr.bf16.mxu0 %v1452
          %1582 = vmatpush1.bf16.msra.mxu0 %v1451
          %1583 = vmatprep.subr.bf16.mxu0 %v1455
          %1584 = vmatpush1.bf16.msra.mxu0 %v1454
          %1585 = vmatprep.mubr.bf16.mxu0 %v1165
          %1586 = vmatmul.mubr.bf16.gmra.mrb[0].mxu0 %v1157
          %v1587 = vpop.f32.mrb[0].mxu0
          %v1588 = vadd.f32 0.0, %v1587
          %v1589 = vpop.f32.mrb[0].mxu0
          %v1590 = vadd.f32 0.0, %v1589
          %v1591 = vpop.f32.mrb[0].mxu0
          %v1592 = vpop.f32.mrb[0].mxu0
          %1593 = vdwg.mxu0
          %1594 = vmatprep.subr.bf16.mxu0 %v1458
          %1595 = vmatpush1.bf16.msra.mxu0 %v1457
          %1596 = vmatprep.subr.bf16.mxu0 %v1461
          %1597 = vmatpush1.bf16.msra.mxu0 %v1460
          %1598 = vmatprep.subr.bf16.mxu0 %v1464
          %1599 = vmatpush1.bf16.msra.mxu0 %v1463
          %1600 = vmatprep.subr.bf16.mxu0 %v1467
          %1601 = vmatpush1.bf16.msra.mxu0 %v1466
          %1602 = vmatprep.subr.bf16.mxu0 %v1470
          %1603 = vmatpush1.bf16.msra.mxu0 %v1469
          %1604 = vmatprep.subr.bf16.mxu0 %v1473
          %1605 = vmatpush1.bf16.msra.mxu0 %v1472
          %1606 = vmatprep.subr.bf16.mxu0 %v1476
          %1607 = vmatpush1.bf16.msra.mxu0 %v1475
          %1608 = vmatprep.subr.bf16.mxu0 %v1479
          %1609 = vmatpush1.bf16.msra.mxu0 %v1478
          %1610 = vmatprep.subr.bf16.mxu0 0
          %1611 = vmatpush1.bf16.msra.mxu0 0
          %1612 = vmatprep.subr.bf16.mxu0 0
          %1613 = vmatpush1.bf16.msra.mxu0 0
          %1614 = vmatprep.subr.bf16.mxu0 0
          %1615 = vmatpush1.bf16.msra.mxu0 0
          %1616 = vmatprep.subr.bf16.mxu0 0
          %1617 = vmatpush1.bf16.msra.mxu0 0
          %1618 = vmatprep.subr.bf16.mxu0 0
          %1619 = vmatpush1.bf16.msra.mxu0 0
          %1620 = vmatprep.subr.bf16.mxu0 0
          %1621 = vmatpush1.bf16.msra.mxu0 0
          %1622 = vmatprep.subr.bf16.mxu0 0
          %1623 = vmatpush1.bf16.msra.mxu0 0
          %1624 = vmatprep.subr.bf16.mxu0 0
          %1625 = vmatpush1.bf16.msra.mxu0 0
          %1626 = vmatprep.mubr.bf16.mxu0 0
          %1627 = vmatmul.mubr.bf16.gmra.mrb[0].mxu0 %v1164
          %v1628 = vpop.f32.mrb[0].mxu0
          %v1629 = vadd.f32 %v1588, %v1628
          %v1630 = vpop.f32.mrb[0].mxu0
          %v1631 = vadd.f32 %v1590, %v1630
          %v1632 = vpop.f32.mrb[0].mxu0
          %v1633 = vpop.f32.mrb[0].mxu0
          %1634 = vdwg.mxu0
          %1635 = vmatprep.subr.bf16.mxu0 0
          %1636 = vmatpush1.bf16.msra.mxu0 %v1411
          %1637 = vmatprep.subr.bf16.mxu0 0
          %1638 = vmatpush1.bf16.msra.mxu0 %v1414
          %1639 = vmatprep.subr.bf16.mxu0 0
          %1640 = vmatpush1.bf16.msra.mxu0 %v1417
          %1641 = vmatprep.subr.bf16.mxu0 0
          %1642 = vmatpush1.bf16.msra.mxu0 %v1420
          %1643 = vmatprep.subr.bf16.mxu0 0
          %1644 = vmatpush1.bf16.msra.mxu0 %v1423
          %1645 = vmatprep.subr.bf16.mxu0 0
          %1646 = vmatpush1.bf16.msra.mxu0 %v1426
          %1647 = vmatprep.subr.bf16.mxu0 0
          %1648 = vmatpush1.bf16.msra.mxu0 %v1429
          %1649 = vmatprep.subr.bf16.mxu0 0
          %1650 = vmatpush1.bf16.msra.mxu0 %v1432
          %1651 = vmatprep.subr.bf16.mxu0 0
          %1652 = vmatpush1.bf16.msra.mxu0 %v1435
          %1653 = vmatprep.subr.bf16.mxu0 0
          %1654 = vmatpush1.bf16.msra.mxu0 %v1438
          %1655 = vmatprep.subr.bf16.mxu0 0
          %1656 = vmatpush1.bf16.msra.mxu0 %v1441
          %1657 = vmatprep.subr.bf16.mxu0 0
          %1658 = vmatpush1.bf16.msra.mxu0 %v1444
          %1659 = vmatprep.subr.bf16.mxu0 0
          %1660 = vmatpush1.bf16.msra.mxu0 %v1447
          %1661 = vmatprep.subr.bf16.mxu0 0
          %1662 = vmatpush1.bf16.msra.mxu0 %v1450
          %1663 = vmatprep.subr.bf16.mxu0 0
          %1664 = vmatpush1.bf16.msra.mxu0 %v1453
          %1665 = vmatprep.subr.bf16.mxu0 0
          %1666 = vmatpush1.bf16.msra.mxu0 %v1456
          %1667 = vmatprep.mubr.bf16.mxu0 %v1165
          %1668 = vmatmul.mubr.bf16.gmra.mrb[0].mxu0 %v1157
          %v1669 = vpop.f32.mrb[0].mxu0
          %v1670 = vadd.f32 0.0, %v1669
          %v1671 = vpop.f32.mrb[0].mxu0
          %v1672 = vpop.f32.mrb[0].mxu0
          %v1673 = vpop.f32.mrb[0].mxu0
          %1674 = vdwg.mxu0
          %1675 = vmatprep.subr.bf16.mxu0 0
          %1676 = vmatpush1.bf16.msra.mxu0 %v1459
          %1677 = vmatprep.subr.bf16.mxu0 0
          %1678 = vmatpush1.bf16.msra.mxu0 %v1462
          %1679 = vmatprep.subr.bf16.mxu0 0
          %1680 = vmatpush1.bf16.msra.mxu0 %v1465
          %1681 = vmatprep.subr.bf16.mxu0 0
          %1682 = vmatpush1.bf16.msra.mxu0 %v1468
          %1683 = vmatprep.subr.bf16.mxu0 0
          %1684 = vmatpush1.bf16.msra.mxu0 %v1471
          %1685 = vmatprep.subr.bf16.mxu0 0
          %1686 = vmatpush1.bf16.msra.mxu0 %v1474
          %1687 = vmatprep.subr.bf16.mxu0 0
          %1688 = vmatpush1.bf16.msra.mxu0 %v1477
          %1689 = vmatprep.subr.bf16.mxu0 0
          %1690 = vmatpush1.bf16.msra.mxu0 %v1480
          %1691 = vmatprep.subr.bf16.mxu0 0
          %1692 = vmatpush1.bf16.msra.mxu0 0
          %1693 = vmatprep.subr.bf16.mxu0 0
          %1694 = vmatpush1.bf16.msra.mxu0 0
          %1695 = vmatprep.subr.bf16.mxu0 0
          %1696 = vmatpush1.bf16.msra.mxu0 0
          %1697 = vmatprep.subr.bf16.mxu0 0
          %1698 = vmatpush1.bf16.msra.mxu0 0
          %1699 = vmatprep.subr.bf16.mxu0 0
          %1700 = vmatpush1.bf16.msra.mxu0 0
          %1701 = vmatprep.subr.bf16.mxu0 0
          %1702 = vmatpush1.bf16.msra.mxu0 0
          %1703 = vmatprep.subr.bf16.mxu0 0
          %1704 = vmatpush1.bf16.msra.mxu0 0
          %1705 = vmatprep.subr.bf16.mxu0 0
          %1706 = vmatpush1.bf16.msra.mxu0 0
          %1707 = vmatprep.mubr.bf16.mxu0 0
          %1708 = vmatmul.mubr.bf16.gmra.mrb[0].mxu0 %v1164
          %v1709 = vpop.f32.mrb[0].mxu0
          %v1710 = vadd.f32 %v1670, %v1709
          %v1711 = vpop.f32.mrb[0].mxu0
          %v1712 = vpop.f32.mrb[0].mxu0
          %v1713 = vpop.f32.mrb[0].mxu0
          %1714 = vdwg.mxu0
          %v1715 = vld [vmem:[%s2] sm:$0xf]
          %v1716 = vpack.c.bf16 %v1629, %v1629
          %v1717 = vpack.c.bf16 %v1631, %v1631
          %v1718 = vpack.c.bf16 %v1710, %v1710
          %vm1719 = vcmask 31744
          %v1721 = vsel %vm1719, %v1715, 0
          %vm1723 = vcmask 1041408
          %v1725 = vsel %vm1723, %v1716, 0
          %v1728 = vsel %vm1723, %v1717, 0
          %v1731 = vsel %vm1723, %v1718, 0
          %1733 = vmatprep.subr.bf16.mxu0 %v1728
          %1734 = vmatpush1.bf16.msra.mxu0 %v1725
          %1735 = vmatprep.subr.bf16.mxu0 0
          %1736 = vmatpush1.bf16.msra.mxu0 0
          %1737 = vmatprep.subr.bf16.mxu0 0
          %1738 = vmatpush1.bf16.msra.mxu0 0
          %1739 = vmatprep.subr.bf16.mxu0 0
          %1740 = vmatpush1.bf16.msra.mxu0 0
          %1741 = vmatprep.subr.bf16.mxu0 0
          %1742 = vmatpush1.bf16.msra.mxu0 0
          %1743 = vmatprep.subr.bf16.mxu0 0
          %1744 = vmatpush1.bf16.msra.mxu0 0
          %1745 = vmatprep.subr.bf16.mxu0 0
          %1746 = vmatpush1.bf16.msra.mxu0 0
          %1747 = vmatprep.subr.bf16.mxu0 0
          %1748 = vmatpush1.bf16.msra.mxu0 0
          %1749 = vmatprep.subr.bf16.mxu0 0
          %1750 = vmatpush1.bf16.msra.mxu0 0
          %1751 = vmatprep.subr.bf16.mxu0 0
          %1752 = vmatpush1.bf16.msra.mxu0 0
          %1753 = vmatprep.subr.bf16.mxu0 0
          %1754 = vmatpush1.bf16.msra.mxu0 0
          %1755 = vmatprep.subr.bf16.mxu0 0
          %1756 = vmatpush1.bf16.msra.mxu0 0
          %1757 = vmatprep.subr.bf16.mxu0 0
          %1758 = vmatpush1.bf16.msra.mxu0 0
          %1759 = vmatprep.subr.bf16.mxu0 0
          %1760 = vmatpush1.bf16.msra.mxu0 0
          %1761 = vmatprep.subr.bf16.mxu0 0
          %1762 = vmatpush1.bf16.msra.mxu0 0
          %1763 = vmatprep.subr.bf16.mxu0 0
          %1764 = vmatpush1.bf16.msra.mxu0 0
          %1765 = vmatprep.mubr.bf16.mxu0 0
          %1766 = vmatmul.mubr.bf16.gmra.mrb[0].mxu0 %v1721
          %v1767 = vpop.f32.mrb[0].mxu0
          %v1768 = vadd.f32 0.0, %v1767
          %v1769 = vpop.f32.mrb[0].mxu0
          %v1770 = vadd.f32 0.0, %v1769
          %v1771 = vpop.f32.mrb[0].mxu0
          %v1772 = vpop.f32.mrb[0].mxu0
          %1773 = vdwg.mxu0
          %1774 = vmatprep.subr.bf16.mxu0 0
          %1775 = vmatpush1.bf16.msra.mxu0 %v1731
          %1776 = vmatprep.subr.bf16.mxu0 0
          %1777 = vmatpush1.bf16.msra.mxu0 0
          %1778 = vmatprep.subr.bf16.mxu0 0
          %1779 = vmatpush1.bf16.msra.mxu0 0
          %1780 = vmatprep.subr.bf16.mxu0 0
          %1781 = vmatpush1.bf16.msra.mxu0 0
          %1782 = vmatprep.subr.bf16.mxu0 0
          %1783 = vmatpush1.bf16.msra.mxu0 0
          %1784 = vmatprep.subr.bf16.mxu0 0
          %1785 = vmatpush1.bf16.msra.mxu0 0
          %1786 = vmatprep.subr.bf16.mxu0 0
          %1787 = vmatpush1.bf16.msra.mxu0 0
          %1788 = vmatprep.subr.bf16.mxu0 0
          %1789 = vmatpush1.bf16.msra.mxu0 0
          %1790 = vmatprep.subr.bf16.mxu0 0
          %1791 = vmatpush1.bf16.msra.mxu0 0
          %1792 = vmatprep.subr.bf16.mxu0 0
          %1793 = vmatpush1.bf16.msra.mxu0 0
          %1794 = vmatprep.subr.bf16.mxu0 0
          %1795 = vmatpush1.bf16.msra.mxu0 0
          %1796 = vmatprep.subr.bf16.mxu0 0
          %1797 = vmatpush1.bf16.msra.mxu0 0
          %1798 = vmatprep.subr.bf16.mxu0 0
          %1799 = vmatpush1.bf16.msra.mxu0 0
          %1800 = vmatprep.subr.bf16.mxu0 0
          %1801 = vmatpush1.bf16.msra.mxu0 0
          %1802 = vmatprep.subr.bf16.mxu0 0
          %1803 = vmatpush1.bf16.msra.mxu0 0
          %1804 = vmatprep.subr.bf16.mxu0 0
          %1805 = vmatpush1.bf16.msra.mxu0 0
          %1806 = vmatprep.mubr.bf16.mxu0 0
          %1807 = vmatmul.mubr.bf16.gmra.mrb[0].mxu0 %v1721
          %v1808 = vpop.f32.mrb[0].mxu0
          %v1809 = vadd.f32 0.0, %v1808
          %v1810 = vpop.f32.mrb[0].mxu0
          %v1811 = vpop.f32.mrb[0].mxu0
          %v1812 = vpop.f32.mrb[0].mxu0
          %1813 = vdwg.mxu0
          %v1814 = vld [vmem:[#allocation2] sm:$0xff]
          %v1815 = vmul.f32 %v1814, 0.0013020834
          %v1816 = vld [vmem:[#allocation3] sm:$0xff]
          %v1817 = vmul.f32 %v1816, 0.0013020834
          %v1818 = vmul.f32 %v1815, %v1815
          %v1819 = vsub.f32 %v1817, %v1818
          %v1820 = vld [vmem:[%s4] sm:$0xff]
          %v1821 = vadd.f32 %v1819, 1e-05
          %v1822 = vrsqrt.pop %v1821
          %v1823 = vmul.f32 %v1820, %v1822
          %v1824 = vmul.f32 %v1815, %v1823
          %1826 = vrot.lane.b32.xlu0 %v1824, 1
          %v1827 = vpop.permute.xlu0 %1826
          %v1829 = vsub.f32 %v1820, %v1827
          %1831 = vset.pattern.permute.xlu0 0
          %1832 = vperm.xlu0 %1831, %v1823
          %v1833 = vpop.permute.xlu0 %1832
          %v1835 = vmul.f32 %v1768, %v1833
          %v1836 = vmul.f32 %v1770, %v1833
          %v1837 = vmul.f32 %v1809, %v1833
          %1839 = vset.pattern.permute.xlu0 1
          %1840 = vperm.xlu0 %1839, %v1829
          %v1841 = vpop.permute.xlu0 %1840
          %v1843 = vadd.f32 %v1835, %v1841
          %v1844 = vadd.f32 %v1836, %v1841
          %v1845 = vadd.f32 %v1837, %v1841
          %v1846 = vmax.f32 %v1843, 0.0
          %v1847 = vmax.f32 %v1844, 0.0
          %v1848 = vmax.f32 %v1845, 0.0
          %v1849 = vld [vmem:[%s3] sm:$0xf]
          %v1850 = vpack.c.bf16 %v1846, %v1846
          %v1851 = vpack.c.bf16 %v1847, %v1847
          %v1852 = vpack.c.bf16 %v1848, %v1848
          %1854 = vset.pattern.permute.xlu0 2
          %1855 = vperm.xlu0 %1854, %v1820
          %v1856 = vpop.permute.xlu0 %1855
          %vm1858 = vcmask 64512
          %v1860 = vsel %vm1858, %v1849, 0
          %vm1862 = vcmask 1043456
          %v1864 = vsel %vm1862, %v1850, 0
          %v1867 = vsel %vm1862, %v1851, 0
          %v1870 = vsel %vm1862, %v1852, 0
          %1872 = vmatprep.subr.bf16.mxu0 %v1867
          %1873 = vmatpush1.bf16.msra.mxu0 %v1864
          %1874 = vmatprep.subr.bf16.mxu0 0
          %1875 = vmatpush1.bf16.msra.mxu0 0
          %1876 = vmatprep.subr.bf16.mxu0 0
          %1877 = vmatpush1.bf16.msra.mxu0 0
          %1878 = vmatprep.subr.bf16.mxu0 0
          %1879 = vmatpush1.bf16.msra.mxu0 0
          %1880 = vmatprep.subr.bf16.mxu0 0
          %1881 = vmatpush1.bf16.msra.mxu0 0
          %1882 = vmatprep.subr.bf16.mxu0 0
          %1883 = vmatpush1.bf16.msra.mxu0 0
          %1884 = vmatprep.subr.bf16.mxu0 0
          %1885 = vmatpush1.bf16.msra.mxu0 0
          %1886 = vmatprep.subr.bf16.mxu0 0
          %1887 = vmatpush1.bf16.msra.mxu0 0
          %1888 = vmatprep.subr.bf16.mxu0 0
          %1889 = vmatpush1.bf16.msra.mxu0 0
          %1890 = vmatprep.subr.bf16.mxu0 0
          %1891 = vmatpush1.bf16.msra.mxu0 0
          %1892 = vmatprep.subr.bf16.mxu0 0
          %1893 = vmatpush1.bf16.msra.mxu0 0
          %1894 = vmatprep.subr.bf16.mxu0 0
          %1895 = vmatpush1.bf16.msra.mxu0 0
          %1896 = vmatprep.subr.bf16.mxu0 0
          %1897 = vmatpush1.bf16.msra.mxu0 0
          %1898 = vmatprep.subr.bf16.mxu0 0
          %1899 = vmatpush1.bf16.msra.mxu0 0
          %1900 = vmatprep.subr.bf16.mxu0 0
          %1901 = vmatpush1.bf16.msra.mxu0 0
          %1902 = vmatprep.subr.bf16.mxu0 0
          %1903 = vmatpush1.bf16.msra.mxu0 0
          %1904 = vmatprep.mubr.bf16.mxu0 0
          %1905 = vmatmul.mubr.bf16.gmra.mrb[0].mxu0 %v1860
          %v1906 = vpop.f32.mrb[0].mxu0
          %v1907 = vadd.f32 %v1856, %v1906
          %v1908 = vpop.f32.mrb[0].mxu0
          %v1909 = vadd.f32 %v1856, %v1908
          %v1910 = vpop.f32.mrb[0].mxu0
          %v1911 = vpop.f32.mrb[0].mxu0
          %1912 = vdwg.mxu0
          %1913 = vmatprep.subr.bf16.mxu0 0
          %1914 = vmatpush1.bf16.msra.mxu0 %v1870
          %1915 = vmatprep.subr.bf16.mxu0 0
          %1916 = vmatpush1.bf16.msra.mxu0 0
          %1917 = vmatprep.subr.bf16.mxu0 0
          %1918 = vmatpush1.bf16.msra.mxu0 0
          %1919 = vmatprep.subr.bf16.mxu0 0
          %1920 = vmatpush1.bf16.msra.mxu0 0
          %1921 = vmatprep.subr.bf16.mxu0 0
          %1922 = vmatpush1.bf16.msra.mxu0 0
          %1923 = vmatprep.subr.bf16.mxu0 0
          %1924 = vmatpush1.bf16.msra.mxu0 0
          %1925 = vmatprep.subr.bf16.mxu0 0
          %1926 = vmatpush1.bf16.msra.mxu0 0
          %1927 = vmatprep.subr.bf16.mxu0 0
          %1928 = vmatpush1.bf16.msra.mxu0 0
          %1929 = vmatprep.subr.bf16.mxu0 0
          %1930 = vmatpush1.bf16.msra.mxu0 0
          %1931 = vmatprep.subr.bf16.mxu0 0
          %1932 = vmatpush1.bf16.msra.mxu0 0
          %1933 = vmatprep.subr.bf16.mxu0 0
          %1934 = vmatpush1.bf16.msra.mxu0 0
          %1935 = vmatprep.subr.bf16.mxu0 0
          %1936 = vmatpush1.bf16.msra.mxu0 0
          %1937 = vmatprep.subr.bf16.mxu0 0
          %1938 = vmatpush1.bf16.msra.mxu0 0
          %1939 = vmatprep.subr.bf16.mxu0 0
          %1940 = vmatpush1.bf16.msra.mxu0 0
          %1941 = vmatprep.subr.bf16.mxu0 0
          %1942 = vmatpush1.bf16.msra.mxu0 0
          %1943 = vmatprep.subr.bf16.mxu0 0
          %1944 = vmatpush1.bf16.msra.mxu0 0
          %1945 = vmatprep.mubr.bf16.mxu0 0
          %1946 = vmatmul.mubr.bf16.gmra.mrb[0].mxu0 %v1860
          %v1947 = vpop.f32.mrb[0].mxu0
          %v1948 = vadd.f32 %v1856, %v1947
          %v1949 = vpop.f32.mrb[0].mxu0
          %v1950 = vpop.f32.mrb[0].mxu0
          %v1951 = vpop.f32.mrb[0].mxu0
          %1952 = vdwg.mxu0
          %1953 = vst [vmem:[%s247] sm:$0xff] %v1907
          %1954 = vst [vmem:[%s247 + $0x8] sm:$0xff] %v1909
          %1955 = vst [vmem:[%s247 + $0x10] sm:$0xff] %v1948
        $region56: #{tpu_custom_call.1} parent=39 // pred_fallthru
          _
        %s1956 = sand.u32 %s152, 1
        %s1957 = scalar_lea.sflag [#allocation6], %s1956
        %s1958 = sand.u32 %s152, 1
        %s1959 = smul.addr %s1958, 24
        %s1960 = scalar_lea.vmem [#allocation7], %s1959
        // Predicated region
        $region57: #{tpu_custom_call.1} parent=39 // pred_check
          %p1961 = pneg %p162
        $region58: #{tpu_custom_call.1} parent=39 // pred_check_branch
          %1963 = sbr.rel (%p1961) target = $region60
        $region59: #{tpu_custom_call.1} parent=39 // pred_region
          %s1964 = smul.u32 %s25, %s24
          %s1965 = smul.u32 3, %s1964
          %s1967 = ssub.s32 384, 384
          %1968 = vsyncadd %s1957, %s1967
          %s1969 = smul.addr %s1965, 128
          %s1970 = scalar_lea.hbm %s5, %s1969
          %s1972 = sshll.u32 %s1960, 4
          %s1973 = int_to_ptr.vmem [resolvable:$true] %s1972
          %1975 = dma.vmem_to_hbm [thread:$0]  %s1973, 384, %s1970, %s1957
        $region60: #{tpu_custom_call.1} parent=39 // pred_fallthru
          _
      $region40: #{tpu_custom_call.1} parent=5 // pred_fallthru
        _
      %p1976 = scmp.le.s32.totalorder 2, %s15
      // Predicated region
      $region61: #{tpu_custom_call.1} parent=5 // pred_check
        %p1977 = pneg %p1976
      $region62: #{tpu_custom_call.1} parent=5 // pred_check_branch
        %1979 = sbr.rel (%p1977) target = $region64
      $region63: #{tpu_custom_call.1} parent=5 // pred_region
        %s1980 = ssub.s32 %s15, 2
        // Predicated region
        $region65: #{tpu_custom_call.1} parent=63 // pred_check
          %p1981 = pneg %p168
        $region66: #{tpu_custom_call.1} parent=63 // pred_check_branch
          %1983 = sbr.rel (%p1981) target = $region68
        $region67: #{tpu_custom_call.1} parent=63 // pred_region
          %s1984 = sand.u32 %s153, 1
          %s1985 = scalar_lea.sflag [#allocation6], %s1984
          %s1986 = sand.u32 %s153, 1
          %s1987 = smul.addr %s1986, 24
          %s1988 = scalar_lea.vmem [#allocation7], %s1987
          %1989 = dma.done %s1985, 384
        $region68: #{tpu_custom_call.1} parent=63 // pred_fallthru
          _
      $region64: #{tpu_custom_call.1} parent=5 // pred_fallthru
        _
    $region6: #{tpu_custom_call.1} parent=1 // loop_footer
      %s19 = sadd.s32 1, %s15
    $region7: #{tpu_custom_call.1} parent=1 // loop_footer_branch
      %14 = sbr.rel target = $region3
    $region8: #{tpu_custom_call.1} parent=1 // loop_exit
      _
    %1990 = vsyncpa [#allocation5], 1
    %s1991 = scalar_lea.sflag [#allocation5], 1
    %1992 = vsyncpa %s1991, 1
    %1993 = vsyncpa [#allocation6], 1
    %s1994 = scalar_lea.sflag [#allocation6], 1
    %1995 = vsyncpa %s1994, 1

</llo_original>
